<compile_context>
chip_gen: v6e
topology: v6e:2x2x1
jax: 0.10.0
libtpu: 0.0.40
codegen_flags: <defaults>
</compile_context>

<pallas_src>
import math

import jax
import jax.numpy as jnp
from jax.experimental import pallas as pl
from jax.experimental.pallas import tpu as pltpu


# 40 MiB scoped-VMEM guard: well under v7x's 64 MiB physical VMEM and far
# above what these kernels actually use (a few MiB).
_VMEM_CAP = 40 * 1024 * 1024


def _bn_norm(x, axes):
    # torch.nn.BatchNorm* (training mode, identity affine): biased var, eps=1e-5.
    # Single-pass statistics (mean + mean of squares) -> half the XLU reductions.
    m = jnp.mean(x, axis=axes, keepdims=True)
    ms = jnp.mean(x * x, axis=axes, keepdims=True)
    v = jnp.maximum(ms - m * m, 0.0)
    return (x - m) * jax.lax.rsqrt(v + 1e-5)


def _round_up(x, m):
    return ((x + m - 1) // m) * m


def _tap(x, off):
    """y[:, d] = x[:, d + off] with zero padding, via XLU roll + lane mask."""
    if off == 0:
        return x
    d = x.shape[-1]
    rolled = pltpu.roll(x, (-off) % d, 1)
    lane = jax.lax.broadcasted_iota(jnp.int32, x.shape, 1)
    if off > 0:
        return jnp.where(lane < d - off, rolled, 0.0)
    return jnp.where(lane >= -off, rolled, 0.0)


# ---------------------------------------------------------------------------
# Kernel 1: bn0 -> conv1d -> bn1 -> relu -> fc (streamed bf16) -> bn2 -> relu
# Grid: one reduction axis over output-channel chunks ("arbitrary").
# ---------------------------------------------------------------------------
def feat_kernel(e1_ref, rel_ref, cw_ref, cb_ref, fw_ref, fb_ref, out_ref,
                x_sc, h_sc):
    c_idx = pl.program_id(0)
    B, D = e1_ref.shape
    K = cw_ref.shape[1] // 2            # kernel_size (any odd K)
    CHUNK = h_sc.shape[1] // D          # output channels handled this step
    pad = K // 2

    # Init (first chunk): bn0 on the stacked (tanh(e1), rel) input, cached in
    # VMEM scratch; output block (resident across the grid) seeded with fc bias.
    @pl.when(c_idx == 0)
    def _():
        x_sc[0] = _bn_norm(jnp.tanh(e1_ref[...]), axes=(0, 1))   # bn0 chan 0
        x_sc[1] = _bn_norm(rel_ref[...], axes=(0, 1))            # bn0 chan 1
        out_ref[...] = jnp.zeros_like(out_ref) + fb_ref[...]

    # Conv taps (shared by every output channel of this chunk): zero-padded
    # x[:, d + k - pad] for both input channels, ordering t = cin*K + k.
    taps = [_tap(x_sc[0], k - pad) for k in range(K)] + \
           [_tap(x_sc[1], k - pad) for k in range(K)]

    # Conv1d(2 -> CHUNK) + bn1 + relu, one output channel at a time, written
    # straight into a VMEM scratch slab in the torch .view(B, -1) ordering
    # (columns c*D + d).  Zero-padded channels come out identically zero.
    base = c_idx * CHUNK
    for lc in range(CHUNK):
        cg = base + lc                                    # global out channel
        h = cb_ref[cg] + jnp.zeros((B, D), jnp.float32)   # SMEM scalar splat
        for t in range(2 * K):
            h = h + taps[t] * cw_ref[cg, t]               # SMEM scalar splat
        # bn1: per output channel, stats over (batch, length)
        h_sc[:, lc * D:(lc + 1) * D] = jnp.maximum(_bn_norm(h, axes=(0, 1)), 0.0)

    # One deep bf16 MXU contraction per chunk (depth CHUNK*D, f32 accumulate)
    # into the resident output block.
    out_ref[...] += jnp.dot(h_sc[...].astype(jnp.bfloat16), fw_ref[...],
                            preferred_element_type=jnp.float32)

    # Finalize (last chunk): bn2 (only if B > 1, static) + relu.
    @pl.when(c_idx == pl.num_programs(0) - 1)
    def _():
        acc = out_ref[...]
        if B > 1:   # mirrors `if batch_size > 1: x = self.bn2(x)`
            acc = _bn_norm(acc, axes=(0,))
        out_ref[...] = jnp.maximum(acc, 0.0)


# ---------------------------------------------------------------------------
# Kernel 2: scores = feat @ tanh(E).T, tiled over wide entity blocks.
# The entity table is streamed in f32 directly (no extra cast/pad HBM pass);
# tanh in f32 (works on all gens), dot in bf16 with f32 accumulation.
# ---------------------------------------------------------------------------
def score_kernel(feat_ref, emb_ref, out_ref):
    e = jnp.tanh(emb_ref[...]).astype(jnp.bfloat16)
    out_ref[...] = jax.lax.dot_general(
        feat_ref[...], e, (((1,), (1,)), ((), ())),
        preferred_element_type=jnp.float32)


def score_mask_kernel(feat_ref, emb_ref, mask_ref, out_ref):
    # partial_embedding branch fused: the mask multiply is free VPU filler
    # inside the already memory-bound score stream.
    e = jnp.tanh(emb_ref[...]).astype(jnp.bfloat16)
    s = jax.lax.dot_general(
        feat_ref[...], e, (((1,), (1,)), ((), ())),
        preferred_element_type=jnp.float32)
    out_ref[...] = s * mask_ref[...]


# ---------------------------------------------------------------------------
# Wrapper (glue: gathers, parameter reshapes, padding, pallas_call plumbing)
# ---------------------------------------------------------------------------
def conv_transe_forward(embedding, emb_rel, triplets, params,
                        partial_embedding=None, tile_n=2048, chunk_c=8):
    N, D = embedding.shape
    B = triplets.shape[0]
    C, cin, K = params["conv_w"].shape
    assert cin == 2 and K % 2 == 1, "module uses Conv1d(2->C) with odd kernel"
    assert D % 128 == 0, "embedding_dim must be lane-aligned (multiple of 128)"
    # TODO(synk): support D not a multiple of 128 by padding D and the conv/fc
    # weights (e.g. the module's default embedding_dim=200).

    # Row gathers are glue (data-dependent indexing of B small rows).
    e1 = embedding[triplets[:, 0]].astype(jnp.float32)   # raw; tanh in-kernel
    rel = emb_rel[triplets[:, 1]].astype(jnp.float32)

    # ---- feat kernel: stream the bf16 fc weight over channel chunks --------
    # Pad C up to a multiple of chunk_c (zero channels are exact no-ops) so the
    # streamed fw chunk stays large regardless of C's divisors.
    chunk_c = max(1, min(chunk_c, C))
    C_pad = _round_up(C, chunk_c)
    n_chunks = C_pad // chunk_c

    cw = params["conv_w"].reshape(C, 2 * K).astype(jnp.float32)   # SMEM scalars
    cb = params["conv_b"].astype(jnp.float32)                      # SMEM scalars
    if C_pad != C:
        cw = jnp.pad(cw, ((0, C_pad - C), (0, 0)))
        cb = jnp.pad(cb, ((0, C_pad - C),))
    fw = params["fc_w"].T                                          # (C*D, D), rows c*D+d
    if C_pad != C:
        fw = jnp.pad(fw, ((0, (C_pad - C) * D), (0, 0)))
    # bf16 stream halves the dominant HBM bytes of the feat kernel; in a real
    # training loop keep this bf16 copy persistent across steps.
    fw = fw.astype(jnp.bfloat16)
    fb = params["fc_b"].reshape(1, D).astype(jnp.float32)

    feat = pl.pallas_call(
        feat_kernel,
        grid=(n_chunks,),
        in_specs=[
            pl.BlockSpec((B, D), lambda c: (0, 0)),
            pl.BlockSpec((B, D), lambda c: (0, 0)),
            pl.BlockSpec(memory_space=pltpu.MemorySpace.SMEM),
            pl.BlockSpec(memory_space=pltpu.MemorySpace.SMEM),
            pl.BlockSpec((chunk_c * D, D), lambda c: (c, 0)),   # streamed bf16 chunk
            pl.BlockSpec((1, D), lambda c: (0, 0)),
        ],
        out_specs=pl.BlockSpec((B, D), lambda c: (0, 0)),       # resident accum
        out_shape=jax.ShapeDtypeStruct((B, D), jnp.float32),
        scratch_shapes=[pltpu.VMEM((2, B, D), jnp.float32),
                        pltpu.VMEM((B, chunk_c * D), jnp.float32)],
        compiler_params=pltpu.CompilerParams(
            dimension_semantics=("arbitrary",),
            vmem_limit_bytes=_VMEM_CAP),
    )(e1, rel, cw, cb, fw, fb)

    # feat is tiny (B, D); quantize once for the bf16 score matmul.
    feat_q = feat.astype(jnp.bfloat16)

    # ---- score kernel: wide, lane-dense entity tiles, f32 table streamed ---
    # Larger tiles (>= ~1 MiB) amortize the ~0.35 us per-grid-step overhead;
    # keep an even grid length where possible so v7x's 2 TCs split evenly.
    tile_n = max(128, min(_round_up(tile_n, 128), _round_up(N, 128)))
    n_pad = _round_up(N, tile_n)
    emb_in = embedding.astype(jnp.float32)
    if n_pad != N:
        emb_in = jnp.pad(emb_in, ((0, n_pad - N), (0, 0)))

    score_grid = (n_pad // tile_n,)
    score_params = pltpu.CompilerParams(
        dimension_semantics=("parallel",), vmem_limit_bytes=_VMEM_CAP)
    feat_spec = pl.BlockSpec((B, D), lambda j: (0, 0))
    emb_spec = pl.BlockSpec((tile_n, D), lambda j: (j, 0))
    out_spec = pl.BlockSpec((B, tile_n), lambda j: (0, j))
    out_shape = jax.ShapeDtypeStruct((B, n_pad), jnp.float32)

    if partial_embedding is None:
        scores = pl.pallas_call(
            score_kernel,
            grid=score_grid,
            in_specs=[feat_spec, emb_spec],
            out_specs=out_spec,
            out_shape=out_shape,
            compiler_params=score_params,
        )(feat_q, emb_in)
    else:
        mask = partial_embedding.astype(jnp.float32)
        if n_pad != N:
            mask = jnp.pad(mask, ((0, 0), (0, n_pad - N)))
        scores = pl.pallas_call(
            score_mask_kernel,
            grid=score_grid,
            in_specs=[feat_spec, emb_spec,
                      pl.BlockSpec((B, tile_n), lambda j: (0, j))],
            out_specs=out_spec,
            out_shape=out_shape,
            compiler_params=score_params,
        )(feat_q, emb_in, mask)

    if n_pad != N:
        scores = scores[:, :N]
    return scores


# ---------------------------------------------------------------------------
# Pure-JAX reference (for a correctness sanity check).  It mimics the
# kernel's deliberate bf16 quantization of the fc weight / fc input / score
# matmul operands (f32 accumulation everywhere, like the MXU).
# ---------------------------------------------------------------------------
def reference_forward(embedding, emb_rel, triplets, params,
                      partial_embedding=None):
    B = triplets.shape[0]
    K = params["conv_w"].shape[2]
    pad = K // 2
    e_all = jnp.tanh(embedding)
    e1 = e_all[triplets[:, 0]][:, None, :]
    rel = emb_rel[triplets[:, 1]][:, None, :]
    x = jnp.concatenate([e1, rel], axis=1)                 # (B, 2, D)
    x = _bn_norm(x, axes=(0, 2))
    y = jax.lax.conv_general_dilated(
        x, params["conv_w"], window_strides=(1,), padding=((pad, pad),),
        dimension_numbers=("NCH", "OIH", "NCH"))
    y = y + params["conv_b"][None, :, None]
    y = jnp.maximum(_bn_norm(y, axes=(0, 2)), 0.0)
    y = y.reshape(B, -1)
    y_q = y.astype(jnp.bfloat16).astype(jnp.float32)
    w_q = params["fc_w"].astype(jnp.bfloat16).astype(jnp.float32)
    y = jnp.dot(y_q, w_q.T,
                precision=jax.lax.Precision.HIGHEST) + params["fc_b"]
    if B > 1:
        y = _bn_norm(y, axes=(0,))
    y = jnp.maximum(y, 0.0)
    f_q = y.astype(jnp.bfloat16).astype(jnp.float32)
    e_q = e_all.astype(jnp.bfloat16).astype(jnp.float32)
    s = jnp.dot(f_q, e_q.T, precision=jax.lax.Precision.HIGHEST)
    if partial_embedding is not None:
        s = s * partial_embedding
    return s


if __name__ == "__main__":
    # Small, module-consistent shapes that still exercise both pipelined grids.
    N, R, D, C, K, B = 1024, 12, 128, 16, 3, 8

    key = jax.random.PRNGKey(0)
    k1, k2, k3, k4, k5, k6, k7, k8, k9 = jax.random.split(key, 9)

    embedding = (jax.random.normal(k1, (N, D)) * 0.5).astype(jnp.float32)
    emb_rel = (jax.random.normal(k2, (R, D)) * 0.5).astype(jnp.float32)
    params = {
        "conv_w": (jax.random.normal(k3, (C, 2, K)) / math.sqrt(2 * K)).astype(jnp.float32),
        "conv_b": (jax.random.normal(k4, (C,)) * 0.01).astype(jnp.float32),
        "fc_w": (jax.random.normal(k5, (D, C * D)) / math.sqrt(C * D)).astype(jnp.float32),
        "fc_b": (jax.random.normal(k6, (D,)) * 0.01).astype(jnp.float32),
        # self.b (num_entities zeros) is registered but unused in forward.
    }
    sub = jax.random.randint(k7, (B,), 0, N)
    relid = jax.random.randint(k8, (B,), 0, R)
    triplets = jnp.stack([sub, relid, jnp.zeros_like(sub)], axis=1)

    # Plain path.
    scores = conv_transe_forward(embedding, emb_rel, triplets, params)
    scores = jax.block_until_ready(scores)
    ref = reference_forward(embedding, emb_rel, triplets, params)
    max_diff = float(jnp.max(jnp.abs(scores - ref)))
    assert scores.shape == (B, N)
    assert max_diff < 5e-2, f"mismatch vs reference: {max_diff}"

    # partial_embedding branch (mask multiply fused into the score kernel).
    mask = (jax.random.uniform(k9, (B, N)) > 0.5).astype(jnp.float32)
    scores_m = conv_transe_forward(embedding, emb_rel, triplets, params,
                                   partial_embedding=mask)
    scores_m = jax.block_until_ready(scores_m)
    ref_m = reference_forward(embedding, emb_rel, triplets, params,
                              partial_embedding=mask)
    max_diff_m = float(jnp.max(jnp.abs(scores_m - ref_m)))
    assert scores_m.shape == (B, N)
    assert max_diff_m < 5e-2, f"masked mismatch vs reference: {max_diff_m}"

    print("KERNEL_OK")
</pallas_src>

<mosaic_0001>
module attributes {stable_mosaic.version = 11 : i64} {
  func.func @feat_kernel(%arg0: i32, %arg1: memref<8x128xf32, #tpu.memory_space<vmem>>, %arg2: memref<8x128xf32, #tpu.memory_space<vmem>>, %arg3: memref<16x6xf32, #tpu.memory_space<smem>>, %arg4: memref<16xf32, #tpu.memory_space<smem>>, %arg5: memref<1024x128xbf16, #tpu.memory_space<vmem>>, %arg6: memref<1x128xf32, #tpu.memory_space<vmem>>, %arg7: memref<8x128xf32, #tpu.memory_space<vmem>>, %arg8: memref<2x8x128xf32, #tpu.memory_space<vmem>>, %arg9: memref<8x1024xf32, #tpu.memory_space<vmem>>) attributes {dimension_semantics = [#tpu.dimension_semantics<arbitrary>], iteration_bounds = array<i64: 2>, scalar_prefetch = 0 : i64, scratch_operands = 2 : i64, tpu.core_type = #tpu.core_type<tc>, window_params = [{pipeline_mode = #tpu.pipeline_mode<synchronous>, transform_indices = @transform_0, window_bounds = array<i64: 8, 128>}, {pipeline_mode = #tpu.pipeline_mode<synchronous>, transform_indices = @transform_1, window_bounds = array<i64: 8, 128>}, {transform_indices = @transform_2, window_bounds = array<i64: 16, 6>}, {transform_indices = @transform_3, window_bounds = array<i64: 16>}, {transform_indices = @transform_4, window_bounds = array<i64: 1024, 128>}, {pipeline_mode = #tpu.pipeline_mode<synchronous>, transform_indices = @transform_5, window_bounds = array<i64: 1, 128>}, {pipeline_mode = #tpu.pipeline_mode<synchronous>, transform_indices = @transform_6, window_bounds = array<i64: 8, 128>}]} {
    %c0_i32 = arith.constant 0 : i32
    %0 = arith.cmpi eq, %arg0, %c0_i32 : i32
    %1 = arith.extui %0 : i1 to i32
    %c0_i32_0 = arith.constant 0 : i32
    %2 = arith.cmpi ne, %1, %c0_i32_0 : i32
    scf.if %2 {
      %c0_156 = arith.constant 0 : index
      %c0_157 = arith.constant 0 : index
      %570 = vector.load %arg1[%c0_156, %c0_157] : memref<8x128xf32, #tpu.memory_space<vmem>>, vector<8x128xf32>
      %571 = math.tanh %570 : vector<8x128xf32>
      %572 = vector.shape_cast %571 : vector<8x128xf32> to vector<1x8x128xf32>
      %cst_158 = arith.constant dense<0.000000e+00> : vector<1xf32>
      %573 = vector.multi_reduction <add>, %572, %cst_158 [1, 2] : vector<1x8x128xf32> to vector<1xf32>
      %574 = vector.shape_cast %573 : vector<1xf32> to vector<1x1x1xf32>
      %575 = vector.extract %574[0, 0, 0] : f32 from vector<1x1x1xf32>
      %576 = vector.broadcast %575 : f32 to vector<1x1xf32>
      %cst_159 = arith.constant 1.024000e+03 : f32
      %577 = vector.broadcast %cst_159 : f32 to vector<1x1xf32>
      %578 = arith.divf %576, %577 : vector<1x1xf32>
      %579 = arith.mulf %571, %571 : vector<8x128xf32>
      %580 = vector.shape_cast %579 : vector<8x128xf32> to vector<1x8x128xf32>
      %cst_160 = arith.constant dense<0.000000e+00> : vector<1xf32>
      %581 = vector.multi_reduction <add>, %580, %cst_160 [1, 2] : vector<1x8x128xf32> to vector<1xf32>
      %582 = vector.shape_cast %581 : vector<1xf32> to vector<1x1x1xf32>
      %583 = vector.extract %582[0, 0, 0] : f32 from vector<1x1x1xf32>
      %584 = vector.broadcast %583 : f32 to vector<1x1xf32>
      %cst_161 = arith.constant 1.024000e+03 : f32
      %585 = vector.broadcast %cst_161 : f32 to vector<1x1xf32>
      %586 = arith.divf %584, %585 : vector<1x1xf32>
      %587 = arith.mulf %578, %578 : vector<1x1xf32>
      %588 = arith.subf %586, %587 : vector<1x1xf32>
      %cst_162 = arith.constant 0.000000e+00 : f32
      %589 = vector.broadcast %cst_162 : f32 to vector<1x1xf32>
      %590 = arith.maximumf %588, %589 : vector<1x1xf32>
      %591 = vector.broadcast %578 : vector<1x1xf32> to vector<8x128xf32>
      %592 = arith.subf %571, %591 : vector<8x128xf32>
      %cst_163 = arith.constant 9.99999974E-6 : f32
      %593 = vector.broadcast %cst_163 : f32 to vector<1x1xf32>
      %594 = arith.addf %590, %593 : vector<1x1xf32>
      %595 = math.rsqrt %594 : vector<1x1xf32>
      %596 = vector.broadcast %595 : vector<1x1xf32> to vector<8x128xf32>
      %597 = arith.mulf %592, %596 : vector<8x128xf32>
      %c0_164 = arith.constant 0 : index
      %c0_165 = arith.constant 0 : index
      %c0_166 = arith.constant 0 : index
      %598 = vector.load %arg8[%c0_164, %c0_165, %c0_166] : memref<2x8x128xf32, #tpu.memory_space<vmem>>, vector<1x8x128xf32>
      %599 = vector.shape_cast %598 : vector<1x8x128xf32> to vector<8x128xf32>
      %600 = vector.shape_cast %597 : vector<8x128xf32> to vector<1x8x128xf32>
      tpu.vector_store %arg8[%c0_164, %c0_165, %c0_166], %600 {strides = array<i32>} : memref<2x8x128xf32, #tpu.memory_space<vmem>>, vector<1x8x128xf32>,
      %c0_167 = arith.constant 0 : index
      %c0_168 = arith.constant 0 : index
      %601 = vector.load %arg2[%c0_167, %c0_168] : memref<8x128xf32, #tpu.memory_space<vmem>>, vector<8x128xf32>
      %602 = vector.shape_cast %601 : vector<8x128xf32> to vector<1x8x128xf32>
      %cst_169 = arith.constant dense<0.000000e+00> : vector<1xf32>
      %603 = vector.multi_reduction <add>, %602, %cst_169 [1, 2] : vector<1x8x128xf32> to vector<1xf32>
      %604 = vector.shape_cast %603 : vector<1xf32> to vector<1x1x1xf32>
      %605 = vector.extract %604[0, 0, 0] : f32 from vector<1x1x1xf32>
      %606 = vector.broadcast %605 : f32 to vector<1x1xf32>
      %cst_170 = arith.constant 1.024000e+03 : f32
      %607 = vector.broadcast %cst_170 : f32 to vector<1x1xf32>
      %608 = arith.divf %606, %607 : vector<1x1xf32>
      %609 = arith.mulf %601, %601 : vector<8x128xf32>
      %610 = vector.shape_cast %609 : vector<8x128xf32> to vector<1x8x128xf32>
      %cst_171 = arith.constant dense<0.000000e+00> : vector<1xf32>
      %611 = vector.multi_reduction <add>, %610, %cst_171 [1, 2] : vector<1x8x128xf32> to vector<1xf32>
      %612 = vector.shape_cast %611 : vector<1xf32> to vector<1x1x1xf32>
      %613 = vector.extract %612[0, 0, 0] : f32 from vector<1x1x1xf32>
      %614 = vector.broadcast %613 : f32 to vector<1x1xf32>
      %cst_172 = arith.constant 1.024000e+03 : f32
      %615 = vector.broadcast %cst_172 : f32 to vector<1x1xf32>
      %616 = arith.divf %614, %615 : vector<1x1xf32>
      %617 = arith.mulf %608, %608 : vector<1x1xf32>
      %618 = arith.subf %616, %617 : vector<1x1xf32>
      %cst_173 = arith.constant 0.000000e+00 : f32
      %619 = vector.broadcast %cst_173 : f32 to vector<1x1xf32>
      %620 = arith.maximumf %618, %619 : vector<1x1xf32>
      %621 = vector.broadcast %608 : vector<1x1xf32> to vector<8x128xf32>
      %622 = arith.subf %601, %621 : vector<8x128xf32>
      %cst_174 = arith.constant 9.99999974E-6 : f32
      %623 = vector.broadcast %cst_174 : f32 to vector<1x1xf32>
      %624 = arith.addf %620, %623 : vector<1x1xf32>
      %625 = math.rsqrt %624 : vector<1x1xf32>
      %626 = vector.broadcast %625 : vector<1x1xf32> to vector<8x128xf32>
      %627 = arith.mulf %622, %626 : vector<8x128xf32>
      %c1_175 = arith.constant 1 : index
      %c0_176 = arith.constant 0 : index
      %c0_177 = arith.constant 0 : index
      %628 = vector.load %arg8[%c1_175, %c0_176, %c0_177] : memref<2x8x128xf32, #tpu.memory_space<vmem>>, vector<1x8x128xf32>
      %629 = vector.shape_cast %628 : vector<1x8x128xf32> to vector<8x128xf32>
      %630 = vector.shape_cast %627 : vector<8x128xf32> to vector<1x8x128xf32>
      tpu.vector_store %arg8[%c1_175, %c0_176, %c0_177], %630 {strides = array<i32>} : memref<2x8x128xf32, #tpu.memory_space<vmem>>, vector<1x8x128xf32>,
      %cst_178 = arith.constant 0.000000e+00 : f32
      %631 = vector.broadcast %cst_178 : f32 to vector<8x128xf32>
      %c0_179 = arith.constant 0 : index
      %c0_180 = arith.constant 0 : index
      %632 = vector.load %arg6[%c0_179, %c0_180] : memref<1x128xf32, #tpu.memory_space<vmem>>, vector<1x128xf32>
      %633 = vector.broadcast %632 : vector<1x128xf32> to vector<8x128xf32>
      %634 = arith.addf %631, %633 : vector<8x128xf32>
      %c0_181 = arith.constant 0 : index
      %c0_182 = arith.constant 0 : index
      %635 = vector.load %arg7[%c0_181, %c0_182] : memref<8x128xf32, #tpu.memory_space<vmem>>, vector<8x128xf32>
      tpu.vector_store %arg7[%c0_181, %c0_182], %634 {strides = array<i32>} : memref<8x128xf32, #tpu.memory_space<vmem>>, vector<8x128xf32>,
    } else {
    }
    %c0 = arith.constant 0 : index
    %c0_1 = arith.constant 0 : index
    %c0_2 = arith.constant 0 : index
    %3 = vector.load %arg8[%c0, %c0_1, %c0_2] : memref<2x8x128xf32, #tpu.memory_space<vmem>>, vector<1x8x128xf32>
    %4 = vector.shape_cast %3 : vector<1x8x128xf32> to vector<8x128xf32>
    %c1_i32 = arith.constant 1 : i32
    %5 = tpu.dynamic_rotate %4 by %c1_i32 dim 1 : vector<8x128xf32>, i32 -> vector<8x128xf32>
    %6 = tpu.iota {dimensions = array<i32: 1>} : vector<8x128xi32>
    %c1_i32_3 = arith.constant 1 : i32
    %7 = vector.broadcast %c1_i32_3 : i32 to vector<8x128xi32>
    %8 = arith.cmpi sge, %6, %7 : vector<8x128xi32>
    %cst = arith.constant 0.000000e+00 : f32
    %9 = vector.broadcast %cst : f32 to vector<8x128xf32>
    %10 = arith.select %8, %5, %9 : vector<8x128xi1>, vector<8x128xf32>
    %c0_4 = arith.constant 0 : index
    %c0_5 = arith.constant 0 : index
    %c0_6 = arith.constant 0 : index
    %11 = vector.load %arg8[%c0_4, %c0_5, %c0_6] : memref<2x8x128xf32, #tpu.memory_space<vmem>>, vector<1x8x128xf32>
    %12 = vector.shape_cast %11 : vector<1x8x128xf32> to vector<8x128xf32>
    %c0_7 = arith.constant 0 : index
    %c0_8 = arith.constant 0 : index
    %c0_9 = arith.constant 0 : index
    %13 = vector.load %arg8[%c0_7, %c0_8, %c0_9] : memref<2x8x128xf32, #tpu.memory_space<vmem>>, vector<1x8x128xf32>
    %14 = vector.shape_cast %13 : vector<1x8x128xf32> to vector<8x128xf32>
    %c127_i32 = arith.constant 127 : i32
    %15 = tpu.dynamic_rotate %14 by %c127_i32 dim 1 : vector<8x128xf32>, i32 -> vector<8x128xf32>
    %16 = tpu.iota {dimensions = array<i32: 1>} : vector<8x128xi32>
    %c127_i32_10 = arith.constant 127 : i32
    %17 = vector.broadcast %c127_i32_10 : i32 to vector<8x128xi32>
    %18 = arith.cmpi slt, %16, %17 : vector<8x128xi32>
    %cst_11 = arith.constant 0.000000e+00 : f32
    %19 = vector.broadcast %cst_11 : f32 to vector<8x128xf32>
    %20 = arith.select %18, %15, %19 : vector<8x128xi1>, vector<8x128xf32>
    %c1 = arith.constant 1 : index
    %c0_12 = arith.constant 0 : index
    %c0_13 = arith.constant 0 : index
    %21 = vector.load %arg8[%c1, %c0_12, %c0_13] : memref<2x8x128xf32, #tpu.memory_space<vmem>>, vector<1x8x128xf32>
    %22 = vector.shape_cast %21 : vector<1x8x128xf32> to vector<8x128xf32>
    %c1_i32_14 = arith.constant 1 : i32
    %23 = tpu.dynamic_rotate %22 by %c1_i32_14 dim 1 : vector<8x128xf32>, i32 -> vector<8x128xf32>
    %24 = tpu.iota {dimensions = array<i32: 1>} : vector<8x128xi32>
    %c1_i32_15 = arith.constant 1 : i32
    %25 = vector.broadcast %c1_i32_15 : i32 to vector<8x128xi32>
    %26 = arith.cmpi sge, %24, %25 : vector<8x128xi32>
    %cst_16 = arith.constant 0.000000e+00 : f32
    %27 = vector.broadcast %cst_16 : f32 to vector<8x128xf32>
    %28 = arith.select %26, %23, %27 : vector<8x128xi1>, vector<8x128xf32>
    %c1_17 = arith.constant 1 : index
    %c0_18 = arith.constant 0 : index
    %c0_19 = arith.constant 0 : index
    %29 = vector.load %arg8[%c1_17, %c0_18, %c0_19] : memref<2x8x128xf32, #tpu.memory_space<vmem>>, vector<1x8x128xf32>
    %30 = vector.shape_cast %29 : vector<1x8x128xf32> to vector<8x128xf32>
    %c1_20 = arith.constant 1 : index
    %c0_21 = arith.constant 0 : index
    %c0_22 = arith.constant 0 : index
    %31 = vector.load %arg8[%c1_20, %c0_21, %c0_22] : memref<2x8x128xf32, #tpu.memory_space<vmem>>, vector<1x8x128xf32>
    %32 = vector.shape_cast %31 : vector<1x8x128xf32> to vector<8x128xf32>
    %c127_i32_23 = arith.constant 127 : i32
    %33 = tpu.dynamic_rotate %32 by %c127_i32_23 dim 1 : vector<8x128xf32>, i32 -> vector<8x128xf32>
    %34 = tpu.iota {dimensions = array<i32: 1>} : vector<8x128xi32>
    %c127_i32_24 = arith.constant 127 : i32
    %35 = vector.broadcast %c127_i32_24 : i32 to vector<8x128xi32>
    %36 = arith.cmpi slt, %34, %35 : vector<8x128xi32>
    %cst_25 = arith.constant 0.000000e+00 : f32
    %37 = vector.broadcast %cst_25 : f32 to vector<8x128xf32>
    %38 = arith.select %36, %33, %37 : vector<8x128xi1>, vector<8x128xf32>
    %c8_i32 = arith.constant 8 : i32
    %39 = arith.muli %arg0, %c8_i32 : i32
    %c0_i32_26 = arith.constant 0 : i32
    %40 = arith.addi %39, %c0_i32_26 : i32
    %41 = arith.index_cast %40 : i32 to index
    %42 = memref.load %arg4[%41] : memref<16xf32, #tpu.memory_space<smem>>
    %cst_27 = arith.constant 0.000000e+00 : f32
    %43 = vector.broadcast %cst_27 : f32 to vector<8x128xf32>
    %44 = vector.broadcast %42 : f32 to vector<8x128xf32>
    %45 = arith.addf %44, %43 : vector<8x128xf32>
    %46 = arith.index_cast %40 : i32 to index
    %c0_28 = arith.constant 0 : index
    %47 = memref.load %arg3[%46, %c0_28] : memref<16x6xf32, #tpu.memory_space<smem>>
    %48 = vector.broadcast %47 : f32 to vector<8x128xf32>
    %49 = arith.mulf %10, %48 : vector<8x128xf32>
    %50 = arith.addf %45, %49 : vector<8x128xf32>
    %51 = arith.index_cast %40 : i32 to index
    %c1_29 = arith.constant 1 : index
    %52 = memref.load %arg3[%51, %c1_29] : memref<16x6xf32, #tpu.memory_space<smem>>
    %53 = vector.broadcast %52 : f32 to vector<8x128xf32>
    %54 = arith.mulf %12, %53 : vector<8x128xf32>
    %55 = arith.addf %50, %54 : vector<8x128xf32>
    %56 = arith.index_cast %40 : i32 to index
    %c2 = arith.constant 2 : index
    %57 = memref.load %arg3[%56, %c2] : memref<16x6xf32, #tpu.memory_space<smem>>
    %58 = vector.broadcast %57 : f32 to vector<8x128xf32>
    %59 = arith.mulf %20, %58 : vector<8x128xf32>
    %60 = arith.addf %55, %59 : vector<8x128xf32>
    %61 = arith.index_cast %40 : i32 to index
    %c3 = arith.constant 3 : index
    %62 = memref.load %arg3[%61, %c3] : memref<16x6xf32, #tpu.memory_space<smem>>
    %63 = vector.broadcast %62 : f32 to vector<8x128xf32>
    %64 = arith.mulf %28, %63 : vector<8x128xf32>
    %65 = arith.addf %60, %64 : vector<8x128xf32>
    %66 = arith.index_cast %40 : i32 to index
    %c4 = arith.constant 4 : index
    %67 = memref.load %arg3[%66, %c4] : memref<16x6xf32, #tpu.memory_space<smem>>
    %68 = vector.broadcast %67 : f32 to vector<8x128xf32>
    %69 = arith.mulf %30, %68 : vector<8x128xf32>
    %70 = arith.addf %65, %69 : vector<8x128xf32>
    %71 = arith.index_cast %40 : i32 to index
    %c5 = arith.constant 5 : index
    %72 = memref.load %arg3[%71, %c5] : memref<16x6xf32, #tpu.memory_space<smem>>
    %73 = vector.broadcast %72 : f32 to vector<8x128xf32>
    %74 = arith.mulf %38, %73 : vector<8x128xf32>
    %75 = arith.addf %70, %74 : vector<8x128xf32>
    %76 = vector.shape_cast %75 : vector<8x128xf32> to vector<1x8x128xf32>
    %cst_30 = arith.constant dense<0.000000e+00> : vector<1xf32>
    %77 = vector.multi_reduction <add>, %76, %cst_30 [1, 2] : vector<1x8x128xf32> to vector<1xf32>
    %78 = vector.shape_cast %77 : vector<1xf32> to vector<1x1x1xf32>
    %79 = vector.extract %78[0, 0, 0] : f32 from vector<1x1x1xf32>
    %80 = vector.broadcast %79 : f32 to vector<1x1xf32>
    %cst_31 = arith.constant 1.024000e+03 : f32
    %81 = vector.broadcast %cst_31 : f32 to vector<1x1xf32>
    %82 = arith.divf %80, %81 : vector<1x1xf32>
    %83 = arith.mulf %75, %75 : vector<8x128xf32>
    %84 = vector.shape_cast %83 : vector<8x128xf32> to vector<1x8x128xf32>
    %cst_32 = arith.constant dense<0.000000e+00> : vector<1xf32>
    %85 = vector.multi_reduction <add>, %84, %cst_32 [1, 2] : vector<1x8x128xf32> to vector<1xf32>
    %86 = vector.shape_cast %85 : vector<1xf32> to vector<1x1x1xf32>
    %87 = vector.extract %86[0, 0, 0] : f32 from vector<1x1x1xf32>
    %88 = vector.broadcast %87 : f32 to vector<1x1xf32>
    %cst_33 = arith.constant 1.024000e+03 : f32
    %89 = vector.broadcast %cst_33 : f32 to vector<1x1xf32>
    %90 = arith.divf %88, %89 : vector<1x1xf32>
    %91 = arith.mulf %82, %82 : vector<1x1xf32>
    %92 = arith.subf %90, %91 : vector<1x1xf32>
    %cst_34 = arith.constant 0.000000e+00 : f32
    %93 = vector.broadcast %cst_34 : f32 to vector<1x1xf32>
    %94 = arith.maximumf %92, %93 : vector<1x1xf32>
    %95 = vector.broadcast %82 : vector<1x1xf32> to vector<8x128xf32>
    %96 = arith.subf %75, %95 : vector<8x128xf32>
    %cst_35 = arith.constant 9.99999974E-6 : f32
    %97 = vector.broadcast %cst_35 : f32 to vector<1x1xf32>
    %98 = arith.addf %94, %97 : vector<1x1xf32>
    %99 = math.rsqrt %98 : vector<1x1xf32>
    %100 = vector.broadcast %99 : vector<1x1xf32> to vector<8x128xf32>
    %101 = arith.mulf %96, %100 : vector<8x128xf32>
    %cst_36 = arith.constant 0.000000e+00 : f32
    %102 = vector.broadcast %cst_36 : f32 to vector<8x128xf32>
    %103 = arith.maximumf %101, %102 : vector<8x128xf32>
    %c0_37 = arith.constant 0 : index
    %c0_38 = arith.constant 0 : index
    %104 = vector.load %arg9[%c0_37, %c0_38] : memref<8x1024xf32, #tpu.memory_space<vmem>>, vector<8x128xf32>
    tpu.vector_store %arg9[%c0_37, %c0_38], %103 {strides = array<i32>} : memref<8x1024xf32, #tpu.memory_space<vmem>>, vector<8x128xf32>,
    %c1_i32_39 = arith.constant 1 : i32
    %105 = arith.addi %39, %c1_i32_39 : i32
    %106 = arith.index_cast %105 : i32 to index
    %107 = memref.load %arg4[%106] : memref<16xf32, #tpu.memory_space<smem>>
    %cst_40 = arith.constant 0.000000e+00 : f32
    %108 = vector.broadcast %cst_40 : f32 to vector<8x128xf32>
    %109 = vector.broadcast %107 : f32 to vector<8x128xf32>
    %110 = arith.addf %109, %108 : vector<8x128xf32>
    %111 = arith.index_cast %105 : i32 to index
    %c0_41 = arith.constant 0 : index
    %112 = memref.load %arg3[%111, %c0_41] : memref<16x6xf32, #tpu.memory_space<smem>>
    %113 = vector.broadcast %112 : f32 to vector<8x128xf32>
    %114 = arith.mulf %10, %113 : vector<8x128xf32>
    %115 = arith.addf %110, %114 : vector<8x128xf32>
    %116 = arith.index_cast %105 : i32 to index
    %c1_42 = arith.constant 1 : index
    %117 = memref.load %arg3[%116, %c1_42] : memref<16x6xf32, #tpu.memory_space<smem>>
    %118 = vector.broadcast %117 : f32 to vector<8x128xf32>
    %119 = arith.mulf %12, %118 : vector<8x128xf32>
    %120 = arith.addf %115, %119 : vector<8x128xf32>
    %121 = arith.index_cast %105 : i32 to index
    %c2_43 = arith.constant 2 : index
    %122 = memref.load %arg3[%121, %c2_43] : memref<16x6xf32, #tpu.memory_space<smem>>
    %123 = vector.broadcast %122 : f32 to vector<8x128xf32>
    %124 = arith.mulf %20, %123 : vector<8x128xf32>
    %125 = arith.addf %120, %124 : vector<8x128xf32>
    %126 = arith.index_cast %105 : i32 to index
    %c3_44 = arith.constant 3 : index
    %127 = memref.load %arg3[%126, %c3_44] : memref<16x6xf32, #tpu.memory_space<smem>>
    %128 = vector.broadcast %127 : f32 to vector<8x128xf32>
    %129 = arith.mulf %28, %128 : vector<8x128xf32>
    %130 = arith.addf %125, %129 : vector<8x128xf32>
    %131 = arith.index_cast %105 : i32 to index
    %c4_45 = arith.constant 4 : index
    %132 = memref.load %arg3[%131, %c4_45] : memref<16x6xf32, #tpu.memory_space<smem>>
    %133 = vector.broadcast %132 : f32 to vector<8x128xf32>
    %134 = arith.mulf %30, %133 : vector<8x128xf32>
    %135 = arith.addf %130, %134 : vector<8x128xf32>
    %136 = arith.index_cast %105 : i32 to index
    %c5_46 = arith.constant 5 : index
    %137 = memref.load %arg3[%136, %c5_46] : memref<16x6xf32, #tpu.memory_space<smem>>
    %138 = vector.broadcast %137 : f32 to vector<8x128xf32>
    %139 = arith.mulf %38, %138 : vector<8x128xf32>
    %140 = arith.addf %135, %139 : vector<8x128xf32>
    %141 = vector.shape_cast %140 : vector<8x128xf32> to vector<1x8x128xf32>
    %cst_47 = arith.constant dense<0.000000e+00> : vector<1xf32>
    %142 = vector.multi_reduction <add>, %141, %cst_47 [1, 2] : vector<1x8x128xf32> to vector<1xf32>
    %143 = vector.shape_cast %142 : vector<1xf32> to vector<1x1x1xf32>
    %144 = vector.extract %143[0, 0, 0] : f32 from vector<1x1x1xf32>
    %145 = vector.broadcast %144 : f32 to vector<1x1xf32>
    %cst_48 = arith.constant 1.024000e+03 : f32
    %146 = vector.broadcast %cst_48 : f32 to vector<1x1xf32>
    %147 = arith.divf %145, %146 : vector<1x1xf32>
    %148 = arith.mulf %140, %140 : vector<8x128xf32>
    %149 = vector.shape_cast %148 : vector<8x128xf32> to vector<1x8x128xf32>
    %cst_49 = arith.constant dense<0.000000e+00> : vector<1xf32>
    %150 = vector.multi_reduction <add>, %149, %cst_49 [1, 2] : vector<1x8x128xf32> to vector<1xf32>
    %151 = vector.shape_cast %150 : vector<1xf32> to vector<1x1x1xf32>
    %152 = vector.extract %151[0, 0, 0] : f32 from vector<1x1x1xf32>
    %153 = vector.broadcast %152 : f32 to vector<1x1xf32>
    %cst_50 = arith.constant 1.024000e+03 : f32
    %154 = vector.broadcast %cst_50 : f32 to vector<1x1xf32>
    %155 = arith.divf %153, %154 : vector<1x1xf32>
    %156 = arith.mulf %147, %147 : vector<1x1xf32>
    %157 = arith.subf %155, %156 : vector<1x1xf32>
    %cst_51 = arith.constant 0.000000e+00 : f32
    %158 = vector.broadcast %cst_51 : f32 to vector<1x1xf32>
    %159 = arith.maximumf %157, %158 : vector<1x1xf32>
    %160 = vector.broadcast %147 : vector<1x1xf32> to vector<8x128xf32>
    %161 = arith.subf %140, %160 : vector<8x128xf32>
    %cst_52 = arith.constant 9.99999974E-6 : f32
    %162 = vector.broadcast %cst_52 : f32 to vector<1x1xf32>
    %163 = arith.addf %159, %162 : vector<1x1xf32>
    %164 = math.rsqrt %163 : vector<1x1xf32>
    %165 = vector.broadcast %164 : vector<1x1xf32> to vector<8x128xf32>
    %166 = arith.mulf %161, %165 : vector<8x128xf32>
    %cst_53 = arith.constant 0.000000e+00 : f32
    %167 = vector.broadcast %cst_53 : f32 to vector<8x128xf32>
    %168 = arith.maximumf %166, %167 : vector<8x128xf32>
    %c0_54 = arith.constant 0 : index
    %c128 = arith.constant 128 : index
    %169 = vector.load %arg9[%c0_54, %c128] : memref<8x1024xf32, #tpu.memory_space<vmem>>, vector<8x128xf32>
    tpu.vector_store %arg9[%c0_54, %c128], %168 {strides = array<i32>} : memref<8x1024xf32, #tpu.memory_space<vmem>>, vector<8x128xf32>,
    %c2_i32 = arith.constant 2 : i32
    %170 = arith.addi %39, %c2_i32 : i32
    %171 = arith.index_cast %170 : i32 to index
    %172 = memref.load %arg4[%171] : memref<16xf32, #tpu.memory_space<smem>>
    %cst_55 = arith.constant 0.000000e+00 : f32
    %173 = vector.broadcast %cst_55 : f32 to vector<8x128xf32>
    %174 = vector.broadcast %172 : f32 to vector<8x128xf32>
    %175 = arith.addf %174, %173 : vector<8x128xf32>
    %176 = arith.index_cast %170 : i32 to index
    %c0_56 = arith.constant 0 : index
    %177 = memref.load %arg3[%176, %c0_56] : memref<16x6xf32, #tpu.memory_space<smem>>
    %178 = vector.broadcast %177 : f32 to vector<8x128xf32>
    %179 = arith.mulf %10, %178 : vector<8x128xf32>
    %180 = arith.addf %175, %179 : vector<8x128xf32>
    %181 = arith.index_cast %170 : i32 to index
    %c1_57 = arith.constant 1 : index
    %182 = memref.load %arg3[%181, %c1_57] : memref<16x6xf32, #tpu.memory_space<smem>>
    %183 = vector.broadcast %182 : f32 to vector<8x128xf32>
    %184 = arith.mulf %12, %183 : vector<8x128xf32>
    %185 = arith.addf %180, %184 : vector<8x128xf32>
    %186 = arith.index_cast %170 : i32 to index
    %c2_58 = arith.constant 2 : index
    %187 = memref.load %arg3[%186, %c2_58] : memref<16x6xf32, #tpu.memory_space<smem>>
    %188 = vector.broadcast %187 : f32 to vector<8x128xf32>
    %189 = arith.mulf %20, %188 : vector<8x128xf32>
    %190 = arith.addf %185, %189 : vector<8x128xf32>
    %191 = arith.index_cast %170 : i32 to index
    %c3_59 = arith.constant 3 : index
    %192 = memref.load %arg3[%191, %c3_59] : memref<16x6xf32, #tpu.memory_space<smem>>
    %193 = vector.broadcast %192 : f32 to vector<8x128xf32>
    %194 = arith.mulf %28, %193 : vector<8x128xf32>
    %195 = arith.addf %190, %194 : vector<8x128xf32>
    %196 = arith.index_cast %170 : i32 to index
    %c4_60 = arith.constant 4 : index
    %197 = memref.load %arg3[%196, %c4_60] : memref<16x6xf32, #tpu.memory_space<smem>>
    %198 = vector.broadcast %197 : f32 to vector<8x128xf32>
    %199 = arith.mulf %30, %198 : vector<8x128xf32>
    %200 = arith.addf %195, %199 : vector<8x128xf32>
    %201 = arith.index_cast %170 : i32 to index
    %c5_61 = arith.constant 5 : index
    %202 = memref.load %arg3[%201, %c5_61] : memref<16x6xf32, #tpu.memory_space<smem>>
    %203 = vector.broadcast %202 : f32 to vector<8x128xf32>
    %204 = arith.mulf %38, %203 : vector<8x128xf32>
    %205 = arith.addf %200, %204 : vector<8x128xf32>
    %206 = vector.shape_cast %205 : vector<8x128xf32> to vector<1x8x128xf32>
    %cst_62 = arith.constant dense<0.000000e+00> : vector<1xf32>
    %207 = vector.multi_reduction <add>, %206, %cst_62 [1, 2] : vector<1x8x128xf32> to vector<1xf32>
    %208 = vector.shape_cast %207 : vector<1xf32> to vector<1x1x1xf32>
    %209 = vector.extract %208[0, 0, 0] : f32 from vector<1x1x1xf32>
    %210 = vector.broadcast %209 : f32 to vector<1x1xf32>
    %cst_63 = arith.constant 1.024000e+03 : f32
    %211 = vector.broadcast %cst_63 : f32 to vector<1x1xf32>
    %212 = arith.divf %210, %211 : vector<1x1xf32>
    %213 = arith.mulf %205, %205 : vector<8x128xf32>
    %214 = vector.shape_cast %213 : vector<8x128xf32> to vector<1x8x128xf32>
    %cst_64 = arith.constant dense<0.000000e+00> : vector<1xf32>
    %215 = vector.multi_reduction <add>, %214, %cst_64 [1, 2] : vector<1x8x128xf32> to vector<1xf32>
    %216 = vector.shape_cast %215 : vector<1xf32> to vector<1x1x1xf32>
    %217 = vector.extract %216[0, 0, 0] : f32 from vector<1x1x1xf32>
    %218 = vector.broadcast %217 : f32 to vector<1x1xf32>
    %cst_65 = arith.constant 1.024000e+03 : f32
    %219 = vector.broadcast %cst_65 : f32 to vector<1x1xf32>
    %220 = arith.divf %218, %219 : vector<1x1xf32>
    %221 = arith.mulf %212, %212 : vector<1x1xf32>
    %222 = arith.subf %220, %221 : vector<1x1xf32>
    %cst_66 = arith.constant 0.000000e+00 : f32
    %223 = vector.broadcast %cst_66 : f32 to vector<1x1xf32>
    %224 = arith.maximumf %222, %223 : vector<1x1xf32>
    %225 = vector.broadcast %212 : vector<1x1xf32> to vector<8x128xf32>
    %226 = arith.subf %205, %225 : vector<8x128xf32>
    %cst_67 = arith.constant 9.99999974E-6 : f32
    %227 = vector.broadcast %cst_67 : f32 to vector<1x1xf32>
    %228 = arith.addf %224, %227 : vector<1x1xf32>
    %229 = math.rsqrt %228 : vector<1x1xf32>
    %230 = vector.broadcast %229 : vector<1x1xf32> to vector<8x128xf32>
    %231 = arith.mulf %226, %230 : vector<8x128xf32>
    %cst_68 = arith.constant 0.000000e+00 : f32
    %232 = vector.broadcast %cst_68 : f32 to vector<8x128xf32>
    %233 = arith.maximumf %231, %232 : vector<8x128xf32>
    %c0_69 = arith.constant 0 : index
    %c256 = arith.constant 256 : index
    %234 = vector.load %arg9[%c0_69, %c256] : memref<8x1024xf32, #tpu.memory_space<vmem>>, vector<8x128xf32>
    tpu.vector_store %arg9[%c0_69, %c256], %233 {strides = array<i32>} : memref<8x1024xf32, #tpu.memory_space<vmem>>, vector<8x128xf32>,
    %c3_i32 = arith.constant 3 : i32
    %235 = arith.addi %39, %c3_i32 : i32
    %236 = arith.index_cast %235 : i32 to index
    %237 = memref.load %arg4[%236] : memref<16xf32, #tpu.memory_space<smem>>
    %cst_70 = arith.constant 0.000000e+00 : f32
    %238 = vector.broadcast %cst_70 : f32 to vector<8x128xf32>
    %239 = vector.broadcast %237 : f32 to vector<8x128xf32>
    %240 = arith.addf %239, %238 : vector<8x128xf32>
    %241 = arith.index_cast %235 : i32 to index
    %c0_71 = arith.constant 0 : index
    %242 = memref.load %arg3[%241, %c0_71] : memref<16x6xf32, #tpu.memory_space<smem>>
    %243 = vector.broadcast %242 : f32 to vector<8x128xf32>
    %244 = arith.mulf %10, %243 : vector<8x128xf32>
    %245 = arith.addf %240, %244 : vector<8x128xf32>
    %246 = arith.index_cast %235 : i32 to index
    %c1_72 = arith.constant 1 : index
    %247 = memref.load %arg3[%246, %c1_72] : memref<16x6xf32, #tpu.memory_space<smem>>
    %248 = vector.broadcast %247 : f32 to vector<8x128xf32>
    %249 = arith.mulf %12, %248 : vector<8x128xf32>
    %250 = arith.addf %245, %249 : vector<8x128xf32>
    %251 = arith.index_cast %235 : i32 to index
    %c2_73 = arith.constant 2 : index
    %252 = memref.load %arg3[%251, %c2_73] : memref<16x6xf32, #tpu.memory_space<smem>>
    %253 = vector.broadcast %252 : f32 to vector<8x128xf32>
    %254 = arith.mulf %20, %253 : vector<8x128xf32>
    %255 = arith.addf %250, %254 : vector<8x128xf32>
    %256 = arith.index_cast %235 : i32 to index
    %c3_74 = arith.constant 3 : index
    %257 = memref.load %arg3[%256, %c3_74] : memref<16x6xf32, #tpu.memory_space<smem>>
    %258 = vector.broadcast %257 : f32 to vector<8x128xf32>
    %259 = arith.mulf %28, %258 : vector<8x128xf32>
    %260 = arith.addf %255, %259 : vector<8x128xf32>
    %261 = arith.index_cast %235 : i32 to index
    %c4_75 = arith.constant 4 : index
    %262 = memref.load %arg3[%261, %c4_75] : memref<16x6xf32, #tpu.memory_space<smem>>
    %263 = vector.broadcast %262 : f32 to vector<8x128xf32>
    %264 = arith.mulf %30, %263 : vector<8x128xf32>
    %265 = arith.addf %260, %264 : vector<8x128xf32>
    %266 = arith.index_cast %235 : i32 to index
    %c5_76 = arith.constant 5 : index
    %267 = memref.load %arg3[%266, %c5_76] : memref<16x6xf32, #tpu.memory_space<smem>>
    %268 = vector.broadcast %267 : f32 to vector<8x128xf32>
    %269 = arith.mulf %38, %268 : vector<8x128xf32>
    %270 = arith.addf %265, %269 : vector<8x128xf32>
    %271 = vector.shape_cast %270 : vector<8x128xf32> to vector<1x8x128xf32>
    %cst_77 = arith.constant dense<0.000000e+00> : vector<1xf32>
    %272 = vector.multi_reduction <add>, %271, %cst_77 [1, 2] : vector<1x8x128xf32> to vector<1xf32>
    %273 = vector.shape_cast %272 : vector<1xf32> to vector<1x1x1xf32>
    %274 = vector.extract %273[0, 0, 0] : f32 from vector<1x1x1xf32>
    %275 = vector.broadcast %274 : f32 to vector<1x1xf32>
    %cst_78 = arith.constant 1.024000e+03 : f32
    %276 = vector.broadcast %cst_78 : f32 to vector<1x1xf32>
    %277 = arith.divf %275, %276 : vector<1x1xf32>
    %278 = arith.mulf %270, %270 : vector<8x128xf32>
    %279 = vector.shape_cast %278 : vector<8x128xf32> to vector<1x8x128xf32>
    %cst_79 = arith.constant dense<0.000000e+00> : vector<1xf32>
    %280 = vector.multi_reduction <add>, %279, %cst_79 [1, 2] : vector<1x8x128xf32> to vector<1xf32>
    %281 = vector.shape_cast %280 : vector<1xf32> to vector<1x1x1xf32>
    %282 = vector.extract %281[0, 0, 0] : f32 from vector<1x1x1xf32>
    %283 = vector.broadcast %282 : f32 to vector<1x1xf32>
    %cst_80 = arith.constant 1.024000e+03 : f32
    %284 = vector.broadcast %cst_80 : f32 to vector<1x1xf32>
    %285 = arith.divf %283, %284 : vector<1x1xf32>
    %286 = arith.mulf %277, %277 : vector<1x1xf32>
    %287 = arith.subf %285, %286 : vector<1x1xf32>
    %cst_81 = arith.constant 0.000000e+00 : f32
    %288 = vector.broadcast %cst_81 : f32 to vector<1x1xf32>
    %289 = arith.maximumf %287, %288 : vector<1x1xf32>
    %290 = vector.broadcast %277 : vector<1x1xf32> to vector<8x128xf32>
    %291 = arith.subf %270, %290 : vector<8x128xf32>
    %cst_82 = arith.constant 9.99999974E-6 : f32
    %292 = vector.broadcast %cst_82 : f32 to vector<1x1xf32>
    %293 = arith.addf %289, %292 : vector<1x1xf32>
    %294 = math.rsqrt %293 : vector<1x1xf32>
    %295 = vector.broadcast %294 : vector<1x1xf32> to vector<8x128xf32>
    %296 = arith.mulf %291, %295 : vector<8x128xf32>
    %cst_83 = arith.constant 0.000000e+00 : f32
    %297 = vector.broadcast %cst_83 : f32 to vector<8x128xf32>
    %298 = arith.maximumf %296, %297 : vector<8x128xf32>
    %c0_84 = arith.constant 0 : index
    %c384 = arith.constant 384 : index
    %299 = vector.load %arg9[%c0_84, %c384] : memref<8x1024xf32, #tpu.memory_space<vmem>>, vector<8x128xf32>
    tpu.vector_store %arg9[%c0_84, %c384], %298 {strides = array<i32>} : memref<8x1024xf32, #tpu.memory_space<vmem>>, vector<8x128xf32>,
    %c4_i32 = arith.constant 4 : i32
    %300 = arith.addi %39, %c4_i32 : i32
    %301 = arith.index_cast %300 : i32 to index
    %302 = memref.load %arg4[%301] : memref<16xf32, #tpu.memory_space<smem>>
    %cst_85 = arith.constant 0.000000e+00 : f32
    %303 = vector.broadcast %cst_85 : f32 to vector<8x128xf32>
    %304 = vector.broadcast %302 : f32 to vector<8x128xf32>
    %305 = arith.addf %304, %303 : vector<8x128xf32>
    %306 = arith.index_cast %300 : i32 to index
    %c0_86 = arith.constant 0 : index
    %307 = memref.load %arg3[%306, %c0_86] : memref<16x6xf32, #tpu.memory_space<smem>>
    %308 = vector.broadcast %307 : f32 to vector<8x128xf32>
    %309 = arith.mulf %10, %308 : vector<8x128xf32>
    %310 = arith.addf %305, %309 : vector<8x128xf32>
    %311 = arith.index_cast %300 : i32 to index
    %c1_87 = arith.constant 1 : index
    %312 = memref.load %arg3[%311, %c1_87] : memref<16x6xf32, #tpu.memory_space<smem>>
    %313 = vector.broadcast %312 : f32 to vector<8x128xf32>
    %314 = arith.mulf %12, %313 : vector<8x128xf32>
    %315 = arith.addf %310, %314 : vector<8x128xf32>
    %316 = arith.index_cast %300 : i32 to index
    %c2_88 = arith.constant 2 : index
    %317 = memref.load %arg3[%316, %c2_88] : memref<16x6xf32, #tpu.memory_space<smem>>
    %318 = vector.broadcast %317 : f32 to vector<8x128xf32>
    %319 = arith.mulf %20, %318 : vector<8x128xf32>
    %320 = arith.addf %315, %319 : vector<8x128xf32>
    %321 = arith.index_cast %300 : i32 to index
    %c3_89 = arith.constant 3 : index
    %322 = memref.load %arg3[%321, %c3_89] : memref<16x6xf32, #tpu.memory_space<smem>>
    %323 = vector.broadcast %322 : f32 to vector<8x128xf32>
    %324 = arith.mulf %28, %323 : vector<8x128xf32>
    %325 = arith.addf %320, %324 : vector<8x128xf32>
    %326 = arith.index_cast %300 : i32 to index
    %c4_90 = arith.constant 4 : index
    %327 = memref.load %arg3[%326, %c4_90] : memref<16x6xf32, #tpu.memory_space<smem>>
    %328 = vector.broadcast %327 : f32 to vector<8x128xf32>
    %329 = arith.mulf %30, %328 : vector<8x128xf32>
    %330 = arith.addf %325, %329 : vector<8x128xf32>
    %331 = arith.index_cast %300 : i32 to index
    %c5_91 = arith.constant 5 : index
    %332 = memref.load %arg3[%331, %c5_91] : memref<16x6xf32, #tpu.memory_space<smem>>
    %333 = vector.broadcast %332 : f32 to vector<8x128xf32>
    %334 = arith.mulf %38, %333 : vector<8x128xf32>
    %335 = arith.addf %330, %334 : vector<8x128xf32>
    %336 = vector.shape_cast %335 : vector<8x128xf32> to vector<1x8x128xf32>
    %cst_92 = arith.constant dense<0.000000e+00> : vector<1xf32>
    %337 = vector.multi_reduction <add>, %336, %cst_92 [1, 2] : vector<1x8x128xf32> to vector<1xf32>
    %338 = vector.shape_cast %337 : vector<1xf32> to vector<1x1x1xf32>
    %339 = vector.extract %338[0, 0, 0] : f32 from vector<1x1x1xf32>
    %340 = vector.broadcast %339 : f32 to vector<1x1xf32>
    %cst_93 = arith.constant 1.024000e+03 : f32
    %341 = vector.broadcast %cst_93 : f32 to vector<1x1xf32>
    %342 = arith.divf %340, %341 : vector<1x1xf32>
    %343 = arith.mulf %335, %335 : vector<8x128xf32>
    %344 = vector.shape_cast %343 : vector<8x128xf32> to vector<1x8x128xf32>
    %cst_94 = arith.constant dense<0.000000e+00> : vector<1xf32>
    %345 = vector.multi_reduction <add>, %344, %cst_94 [1, 2] : vector<1x8x128xf32> to vector<1xf32>
    %346 = vector.shape_cast %345 : vector<1xf32> to vector<1x1x1xf32>
    %347 = vector.extract %346[0, 0, 0] : f32 from vector<1x1x1xf32>
    %348 = vector.broadcast %347 : f32 to vector<1x1xf32>
    %cst_95 = arith.constant 1.024000e+03 : f32
    %349 = vector.broadcast %cst_95 : f32 to vector<1x1xf32>
    %350 = arith.divf %348, %349 : vector<1x1xf32>
    %351 = arith.mulf %342, %342 : vector<1x1xf32>
    %352 = arith.subf %350, %351 : vector<1x1xf32>
    %cst_96 = arith.constant 0.000000e+00 : f32
    %353 = vector.broadcast %cst_96 : f32 to vector<1x1xf32>
    %354 = arith.maximumf %352, %353 : vector<1x1xf32>
    %355 = vector.broadcast %342 : vector<1x1xf32> to vector<8x128xf32>
    %356 = arith.subf %335, %355 : vector<8x128xf32>
    %cst_97 = arith.constant 9.99999974E-6 : f32
    %357 = vector.broadcast %cst_97 : f32 to vector<1x1xf32>
    %358 = arith.addf %354, %357 : vector<1x1xf32>
    %359 = math.rsqrt %358 : vector<1x1xf32>
    %360 = vector.broadcast %359 : vector<1x1xf32> to vector<8x128xf32>
    %361 = arith.mulf %356, %360 : vector<8x128xf32>
    %cst_98 = arith.constant 0.000000e+00 : f32
    %362 = vector.broadcast %cst_98 : f32 to vector<8x128xf32>
    %363 = arith.maximumf %361, %362 : vector<8x128xf32>
    %c0_99 = arith.constant 0 : index
    %c512 = arith.constant 512 : index
    %364 = vector.load %arg9[%c0_99, %c512] : memref<8x1024xf32, #tpu.memory_space<vmem>>, vector<8x128xf32>
    tpu.vector_store %arg9[%c0_99, %c512], %363 {strides = array<i32>} : memref<8x1024xf32, #tpu.memory_space<vmem>>, vector<8x128xf32>,
    %c5_i32 = arith.constant 5 : i32
    %365 = arith.addi %39, %c5_i32 : i32
    %366 = arith.index_cast %365 : i32 to index
    %367 = memref.load %arg4[%366] : memref<16xf32, #tpu.memory_space<smem>>
    %cst_100 = arith.constant 0.000000e+00 : f32
    %368 = vector.broadcast %cst_100 : f32 to vector<8x128xf32>
    %369 = vector.broadcast %367 : f32 to vector<8x128xf32>
    %370 = arith.addf %369, %368 : vector<8x128xf32>
    %371 = arith.index_cast %365 : i32 to index
    %c0_101 = arith.constant 0 : index
    %372 = memref.load %arg3[%371, %c0_101] : memref<16x6xf32, #tpu.memory_space<smem>>
    %373 = vector.broadcast %372 : f32 to vector<8x128xf32>
    %374 = arith.mulf %10, %373 : vector<8x128xf32>
    %375 = arith.addf %370, %374 : vector<8x128xf32>
    %376 = arith.index_cast %365 : i32 to index
    %c1_102 = arith.constant 1 : index
    %377 = memref.load %arg3[%376, %c1_102] : memref<16x6xf32, #tpu.memory_space<smem>>
    %378 = vector.broadcast %377 : f32 to vector<8x128xf32>
    %379 = arith.mulf %12, %378 : vector<8x128xf32>
    %380 = arith.addf %375, %379 : vector<8x128xf32>
    %381 = arith.index_cast %365 : i32 to index
    %c2_103 = arith.constant 2 : index
    %382 = memref.load %arg3[%381, %c2_103] : memref<16x6xf32, #tpu.memory_space<smem>>
    %383 = vector.broadcast %382 : f32 to vector<8x128xf32>
    %384 = arith.mulf %20, %383 : vector<8x128xf32>
    %385 = arith.addf %380, %384 : vector<8x128xf32>
    %386 = arith.index_cast %365 : i32 to index
    %c3_104 = arith.constant 3 : index
    %387 = memref.load %arg3[%386, %c3_104] : memref<16x6xf32, #tpu.memory_space<smem>>
    %388 = vector.broadcast %387 : f32 to vector<8x128xf32>
    %389 = arith.mulf %28, %388 : vector<8x128xf32>
    %390 = arith.addf %385, %389 : vector<8x128xf32>
    %391 = arith.index_cast %365 : i32 to index
    %c4_105 = arith.constant 4 : index
    %392 = memref.load %arg3[%391, %c4_105] : memref<16x6xf32, #tpu.memory_space<smem>>
    %393 = vector.broadcast %392 : f32 to vector<8x128xf32>
    %394 = arith.mulf %30, %393 : vector<8x128xf32>
    %395 = arith.addf %390, %394 : vector<8x128xf32>
    %396 = arith.index_cast %365 : i32 to index
    %c5_106 = arith.constant 5 : index
    %397 = memref.load %arg3[%396, %c5_106] : memref<16x6xf32, #tpu.memory_space<smem>>
    %398 = vector.broadcast %397 : f32 to vector<8x128xf32>
    %399 = arith.mulf %38, %398 : vector<8x128xf32>
    %400 = arith.addf %395, %399 : vector<8x128xf32>
    %401 = vector.shape_cast %400 : vector<8x128xf32> to vector<1x8x128xf32>
    %cst_107 = arith.constant dense<0.000000e+00> : vector<1xf32>
    %402 = vector.multi_reduction <add>, %401, %cst_107 [1, 2] : vector<1x8x128xf32> to vector<1xf32>
    %403 = vector.shape_cast %402 : vector<1xf32> to vector<1x1x1xf32>
    %404 = vector.extract %403[0, 0, 0] : f32 from vector<1x1x1xf32>
    %405 = vector.broadcast %404 : f32 to vector<1x1xf32>
    %cst_108 = arith.constant 1.024000e+03 : f32
    %406 = vector.broadcast %cst_108 : f32 to vector<1x1xf32>
    %407 = arith.divf %405, %406 : vector<1x1xf32>
    %408 = arith.mulf %400, %400 : vector<8x128xf32>
    %409 = vector.shape_cast %408 : vector<8x128xf32> to vector<1x8x128xf32>
    %cst_109 = arith.constant dense<0.000000e+00> : vector<1xf32>
    %410 = vector.multi_reduction <add>, %409, %cst_109 [1, 2] : vector<1x8x128xf32> to vector<1xf32>
    %411 = vector.shape_cast %410 : vector<1xf32> to vector<1x1x1xf32>
    %412 = vector.extract %411[0, 0, 0] : f32 from vector<1x1x1xf32>
    %413 = vector.broadcast %412 : f32 to vector<1x1xf32>
    %cst_110 = arith.constant 1.024000e+03 : f32
    %414 = vector.broadcast %cst_110 : f32 to vector<1x1xf32>
    %415 = arith.divf %413, %414 : vector<1x1xf32>
    %416 = arith.mulf %407, %407 : vector<1x1xf32>
    %417 = arith.subf %415, %416 : vector<1x1xf32>
    %cst_111 = arith.constant 0.000000e+00 : f32
    %418 = vector.broadcast %cst_111 : f32 to vector<1x1xf32>
    %419 = arith.maximumf %417, %418 : vector<1x1xf32>
    %420 = vector.broadcast %407 : vector<1x1xf32> to vector<8x128xf32>
    %421 = arith.subf %400, %420 : vector<8x128xf32>
    %cst_112 = arith.constant 9.99999974E-6 : f32
    %422 = vector.broadcast %cst_112 : f32 to vector<1x1xf32>
    %423 = arith.addf %419, %422 : vector<1x1xf32>
    %424 = math.rsqrt %423 : vector<1x1xf32>
    %425 = vector.broadcast %424 : vector<1x1xf32> to vector<8x128xf32>
    %426 = arith.mulf %421, %425 : vector<8x128xf32>
    %cst_113 = arith.constant 0.000000e+00 : f32
    %427 = vector.broadcast %cst_113 : f32 to vector<8x128xf32>
    %428 = arith.maximumf %426, %427 : vector<8x128xf32>
    %c0_114 = arith.constant 0 : index
    %c640 = arith.constant 640 : index
    %429 = vector.load %arg9[%c0_114, %c640] : memref<8x1024xf32, #tpu.memory_space<vmem>>, vector<8x128xf32>
    tpu.vector_store %arg9[%c0_114, %c640], %428 {strides = array<i32>} : memref<8x1024xf32, #tpu.memory_space<vmem>>, vector<8x128xf32>,
    %c6_i32 = arith.constant 6 : i32
    %430 = arith.addi %39, %c6_i32 : i32
    %431 = arith.index_cast %430 : i32 to index
    %432 = memref.load %arg4[%431] : memref<16xf32, #tpu.memory_space<smem>>
    %cst_115 = arith.constant 0.000000e+00 : f32
    %433 = vector.broadcast %cst_115 : f32 to vector<8x128xf32>
    %434 = vector.broadcast %432 : f32 to vector<8x128xf32>
    %435 = arith.addf %434, %433 : vector<8x128xf32>
    %436 = arith.index_cast %430 : i32 to index
    %c0_116 = arith.constant 0 : index
    %437 = memref.load %arg3[%436, %c0_116] : memref<16x6xf32, #tpu.memory_space<smem>>
    %438 = vector.broadcast %437 : f32 to vector<8x128xf32>
    %439 = arith.mulf %10, %438 : vector<8x128xf32>
    %440 = arith.addf %435, %439 : vector<8x128xf32>
    %441 = arith.index_cast %430 : i32 to index
    %c1_117 = arith.constant 1 : index
    %442 = memref.load %arg3[%441, %c1_117] : memref<16x6xf32, #tpu.memory_space<smem>>
    %443 = vector.broadcast %442 : f32 to vector<8x128xf32>
    %444 = arith.mulf %12, %443 : vector<8x128xf32>
    %445 = arith.addf %440, %444 : vector<8x128xf32>
    %446 = arith.index_cast %430 : i32 to index
    %c2_118 = arith.constant 2 : index
    %447 = memref.load %arg3[%446, %c2_118] : memref<16x6xf32, #tpu.memory_space<smem>>
    %448 = vector.broadcast %447 : f32 to vector<8x128xf32>
    %449 = arith.mulf %20, %448 : vector<8x128xf32>
    %450 = arith.addf %445, %449 : vector<8x128xf32>
    %451 = arith.index_cast %430 : i32 to index
    %c3_119 = arith.constant 3 : index
    %452 = memref.load %arg3[%451, %c3_119] : memref<16x6xf32, #tpu.memory_space<smem>>
    %453 = vector.broadcast %452 : f32 to vector<8x128xf32>
    %454 = arith.mulf %28, %453 : vector<8x128xf32>
    %455 = arith.addf %450, %454 : vector<8x128xf32>
    %456 = arith.index_cast %430 : i32 to index
    %c4_120 = arith.constant 4 : index
    %457 = memref.load %arg3[%456, %c4_120] : memref<16x6xf32, #tpu.memory_space<smem>>
    %458 = vector.broadcast %457 : f32 to vector<8x128xf32>
    %459 = arith.mulf %30, %458 : vector<8x128xf32>
    %460 = arith.addf %455, %459 : vector<8x128xf32>
    %461 = arith.index_cast %430 : i32 to index
    %c5_121 = arith.constant 5 : index
    %462 = memref.load %arg3[%461, %c5_121] : memref<16x6xf32, #tpu.memory_space<smem>>
    %463 = vector.broadcast %462 : f32 to vector<8x128xf32>
    %464 = arith.mulf %38, %463 : vector<8x128xf32>
    %465 = arith.addf %460, %464 : vector<8x128xf32>
    %466 = vector.shape_cast %465 : vector<8x128xf32> to vector<1x8x128xf32>
    %cst_122 = arith.constant dense<0.000000e+00> : vector<1xf32>
    %467 = vector.multi_reduction <add>, %466, %cst_122 [1, 2] : vector<1x8x128xf32> to vector<1xf32>
    %468 = vector.shape_cast %467 : vector<1xf32> to vector<1x1x1xf32>
    %469 = vector.extract %468[0, 0, 0] : f32 from vector<1x1x1xf32>
    %470 = vector.broadcast %469 : f32 to vector<1x1xf32>
    %cst_123 = arith.constant 1.024000e+03 : f32
    %471 = vector.broadcast %cst_123 : f32 to vector<1x1xf32>
    %472 = arith.divf %470, %471 : vector<1x1xf32>
    %473 = arith.mulf %465, %465 : vector<8x128xf32>
    %474 = vector.shape_cast %473 : vector<8x128xf32> to vector<1x8x128xf32>
    %cst_124 = arith.constant dense<0.000000e+00> : vector<1xf32>
    %475 = vector.multi_reduction <add>, %474, %cst_124 [1, 2] : vector<1x8x128xf32> to vector<1xf32>
    %476 = vector.shape_cast %475 : vector<1xf32> to vector<1x1x1xf32>
    %477 = vector.extract %476[0, 0, 0] : f32 from vector<1x1x1xf32>
    %478 = vector.broadcast %477 : f32 to vector<1x1xf32>
    %cst_125 = arith.constant 1.024000e+03 : f32
    %479 = vector.broadcast %cst_125 : f32 to vector<1x1xf32>
    %480 = arith.divf %478, %479 : vector<1x1xf32>
    %481 = arith.mulf %472, %472 : vector<1x1xf32>
    %482 = arith.subf %480, %481 : vector<1x1xf32>
    %cst_126 = arith.constant 0.000000e+00 : f32
    %483 = vector.broadcast %cst_126 : f32 to vector<1x1xf32>
    %484 = arith.maximumf %482, %483 : vector<1x1xf32>
    %485 = vector.broadcast %472 : vector<1x1xf32> to vector<8x128xf32>
    %486 = arith.subf %465, %485 : vector<8x128xf32>
    %cst_127 = arith.constant 9.99999974E-6 : f32
    %487 = vector.broadcast %cst_127 : f32 to vector<1x1xf32>
    %488 = arith.addf %484, %487 : vector<1x1xf32>
    %489 = math.rsqrt %488 : vector<1x1xf32>
    %490 = vector.broadcast %489 : vector<1x1xf32> to vector<8x128xf32>
    %491 = arith.mulf %486, %490 : vector<8x128xf32>
    %cst_128 = arith.constant 0.000000e+00 : f32
    %492 = vector.broadcast %cst_128 : f32 to vector<8x128xf32>
    %493 = arith.maximumf %491, %492 : vector<8x128xf32>
    %c0_129 = arith.constant 0 : index
    %c768 = arith.constant 768 : index
    %494 = vector.load %arg9[%c0_129, %c768] : memref<8x1024xf32, #tpu.memory_space<vmem>>, vector<8x128xf32>
    tpu.vector_store %arg9[%c0_129, %c768], %493 {strides = array<i32>} : memref<8x1024xf32, #tpu.memory_space<vmem>>, vector<8x128xf32>,
    %c7_i32 = arith.constant 7 : i32
    %495 = arith.addi %39, %c7_i32 : i32
    %496 = arith.index_cast %495 : i32 to index
    %497 = memref.load %arg4[%496] : memref<16xf32, #tpu.memory_space<smem>>
    %cst_130 = arith.constant 0.000000e+00 : f32
    %498 = vector.broadcast %cst_130 : f32 to vector<8x128xf32>
    %499 = vector.broadcast %497 : f32 to vector<8x128xf32>
    %500 = arith.addf %499, %498 : vector<8x128xf32>
    %501 = arith.index_cast %495 : i32 to index
    %c0_131 = arith.constant 0 : index
    %502 = memref.load %arg3[%501, %c0_131] : memref<16x6xf32, #tpu.memory_space<smem>>
    %503 = vector.broadcast %502 : f32 to vector<8x128xf32>
    %504 = arith.mulf %10, %503 : vector<8x128xf32>
    %505 = arith.addf %500, %504 : vector<8x128xf32>
    %506 = arith.index_cast %495 : i32 to index
    %c1_132 = arith.constant 1 : index
    %507 = memref.load %arg3[%506, %c1_132] : memref<16x6xf32, #tpu.memory_space<smem>>
    %508 = vector.broadcast %507 : f32 to vector<8x128xf32>
    %509 = arith.mulf %12, %508 : vector<8x128xf32>
    %510 = arith.addf %505, %509 : vector<8x128xf32>
    %511 = arith.index_cast %495 : i32 to index
    %c2_133 = arith.constant 2 : index
    %512 = memref.load %arg3[%511, %c2_133] : memref<16x6xf32, #tpu.memory_space<smem>>
    %513 = vector.broadcast %512 : f32 to vector<8x128xf32>
    %514 = arith.mulf %20, %513 : vector<8x128xf32>
    %515 = arith.addf %510, %514 : vector<8x128xf32>
    %516 = arith.index_cast %495 : i32 to index
    %c3_134 = arith.constant 3 : index
    %517 = memref.load %arg3[%516, %c3_134] : memref<16x6xf32, #tpu.memory_space<smem>>
    %518 = vector.broadcast %517 : f32 to vector<8x128xf32>
    %519 = arith.mulf %28, %518 : vector<8x128xf32>
    %520 = arith.addf %515, %519 : vector<8x128xf32>
    %521 = arith.index_cast %495 : i32 to index
    %c4_135 = arith.constant 4 : index
    %522 = memref.load %arg3[%521, %c4_135] : memref<16x6xf32, #tpu.memory_space<smem>>
    %523 = vector.broadcast %522 : f32 to vector<8x128xf32>
    %524 = arith.mulf %30, %523 : vector<8x128xf32>
    %525 = arith.addf %520, %524 : vector<8x128xf32>
    %526 = arith.index_cast %495 : i32 to index
    %c5_136 = arith.constant 5 : index
    %527 = memref.load %arg3[%526, %c5_136] : memref<16x6xf32, #tpu.memory_space<smem>>
    %528 = vector.broadcast %527 : f32 to vector<8x128xf32>
    %529 = arith.mulf %38, %528 : vector<8x128xf32>
    %530 = arith.addf %525, %529 : vector<8x128xf32>
    %531 = vector.shape_cast %530 : vector<8x128xf32> to vector<1x8x128xf32>
    %cst_137 = arith.constant dense<0.000000e+00> : vector<1xf32>
    %532 = vector.multi_reduction <add>, %531, %cst_137 [1, 2] : vector<1x8x128xf32> to vector<1xf32>
    %533 = vector.shape_cast %532 : vector<1xf32> to vector<1x1x1xf32>
    %534 = vector.extract %533[0, 0, 0] : f32 from vector<1x1x1xf32>
    %535 = vector.broadcast %534 : f32 to vector<1x1xf32>
    %cst_138 = arith.constant 1.024000e+03 : f32
    %536 = vector.broadcast %cst_138 : f32 to vector<1x1xf32>
    %537 = arith.divf %535, %536 : vector<1x1xf32>
    %538 = arith.mulf %530, %530 : vector<8x128xf32>
    %539 = vector.shape_cast %538 : vector<8x128xf32> to vector<1x8x128xf32>
    %cst_139 = arith.constant dense<0.000000e+00> : vector<1xf32>
    %540 = vector.multi_reduction <add>, %539, %cst_139 [1, 2] : vector<1x8x128xf32> to vector<1xf32>
    %541 = vector.shape_cast %540 : vector<1xf32> to vector<1x1x1xf32>
    %542 = vector.extract %541[0, 0, 0] : f32 from vector<1x1x1xf32>
    %543 = vector.broadcast %542 : f32 to vector<1x1xf32>
    %cst_140 = arith.constant 1.024000e+03 : f32
    %544 = vector.broadcast %cst_140 : f32 to vector<1x1xf32>
    %545 = arith.divf %543, %544 : vector<1x1xf32>
    %546 = arith.mulf %537, %537 : vector<1x1xf32>
    %547 = arith.subf %545, %546 : vector<1x1xf32>
    %cst_141 = arith.constant 0.000000e+00 : f32
    %548 = vector.broadcast %cst_141 : f32 to vector<1x1xf32>
    %549 = arith.maximumf %547, %548 : vector<1x1xf32>
    %550 = vector.broadcast %537 : vector<1x1xf32> to vector<8x128xf32>
    %551 = arith.subf %530, %550 : vector<8x128xf32>
    %cst_142 = arith.constant 9.99999974E-6 : f32
    %552 = vector.broadcast %cst_142 : f32 to vector<1x1xf32>
    %553 = arith.addf %549, %552 : vector<1x1xf32>
    %554 = math.rsqrt %553 : vector<1x1xf32>
    %555 = vector.broadcast %554 : vector<1x1xf32> to vector<8x128xf32>
    %556 = arith.mulf %551, %555 : vector<8x128xf32>
    %cst_143 = arith.constant 0.000000e+00 : f32
    %557 = vector.broadcast %cst_143 : f32 to vector<8x128xf32>
    %558 = arith.maximumf %556, %557 : vector<8x128xf32>
    %c0_144 = arith.constant 0 : index
    %c896 = arith.constant 896 : index
    %559 = vector.load %arg9[%c0_144, %c896] : memref<8x1024xf32, #tpu.memory_space<vmem>>, vector<8x128xf32>
    tpu.vector_store %arg9[%c0_144, %c896], %558 {strides = array<i32>} : memref<8x1024xf32, #tpu.memory_space<vmem>>, vector<8x128xf32>,
    %c0_145 = arith.constant 0 : index
    %c0_146 = arith.constant 0 : index
    %560 = vector.load %arg7[%c0_145, %c0_146] : memref<8x128xf32, #tpu.memory_space<vmem>>, vector<8x128xf32>
    %c0_147 = arith.constant 0 : index
    %c0_148 = arith.constant 0 : index
    %561 = vector.load %arg9[%c0_147, %c0_148] : memref<8x1024xf32, #tpu.memory_space<vmem>>, vector<8x1024xf32>
    %562 = arith.truncf %561 : vector<8x1024xf32> to vector<8x1024xbf16>
    %c0_149 = arith.constant 0 : index
    %c0_150 = arith.constant 0 : index
    %563 = vector.load %arg5[%c0_149, %c0_150] : memref<1024x128xbf16, #tpu.memory_space<vmem>>, vector<1024x128xbf16>
    %cst_151 = arith.constant dense<0.000000e+00> : vector<8x128xf32>
    %564 = tpu.matmul %562, %563, %cst_151 {dimension_numbers = #tpu.dot_dimension_numbers<[1], [0], [0], [1], [0, 0, 1, 1], [], []>} : vector<8x1024xbf16>, vector<1024x128xbf16>, vector<8x128xf32> -> vector<8x128xf32>
    %565 = arith.addf %560, %564 : vector<8x128xf32>
    %c0_152 = arith.constant 0 : index
    %c0_153 = arith.constant 0 : index
    %566 = vector.load %arg7[%c0_152, %c0_153] : memref<8x128xf32, #tpu.memory_space<vmem>>, vector<8x128xf32>
    tpu.vector_store %arg7[%c0_152, %c0_153], %565 {strides = array<i32>} : memref<8x128xf32, #tpu.memory_space<vmem>>, vector<8x128xf32>,
    %c1_i32_154 = arith.constant 1 : i32
    %567 = arith.cmpi eq, %arg0, %c1_i32_154 : i32
    %568 = arith.extui %567 : i1 to i32
    %c0_i32_155 = arith.constant 0 : i32
    %569 = arith.cmpi ne, %568, %c0_i32_155 : i32
    scf.if %569 {
      %c0_156 = arith.constant 0 : index
      %c0_157 = arith.constant 0 : index
      %570 = vector.load %arg7[%c0_156, %c0_157] : memref<8x128xf32, #tpu.memory_space<vmem>>, vector<8x128xf32>
      %cst_158 = arith.constant dense<0.000000e+00> : vector<128xf32>
      %571 = vector.multi_reduction <add>, %570, %cst_158 [0] : vector<8x128xf32> to vector<128xf32>
      %572 = vector.shape_cast %571 : vector<128xf32> to vector<1x128xf32>
      %cst_159 = arith.constant 8.000000e+00 : f32
      %573 = vector.broadcast %cst_159 : f32 to vector<1x128xf32>
      %574 = arith.divf %572, %573 : vector<1x128xf32>
      %575 = arith.mulf %570, %570 : vector<8x128xf32>
      %cst_160 = arith.constant dense<0.000000e+00> : vector<128xf32>
      %576 = vector.multi_reduction <add>, %575, %cst_160 [0] : vector<8x128xf32> to vector<128xf32>
      %577 = vector.shape_cast %576 : vector<128xf32> to vector<1x128xf32>
      %cst_161 = arith.constant 8.000000e+00 : f32
      %578 = vector.broadcast %cst_161 : f32 to vector<1x128xf32>
      %579 = arith.divf %577, %578 : vector<1x128xf32>
      %580 = arith.mulf %574, %574 : vector<1x128xf32>
      %581 = arith.subf %579, %580 : vector<1x128xf32>
      %cst_162 = arith.constant 0.000000e+00 : f32
      %582 = vector.broadcast %cst_162 : f32 to vector<1x128xf32>
      %583 = arith.maximumf %581, %582 : vector<1x128xf32>
      %584 = vector.broadcast %574 : vector<1x128xf32> to vector<8x128xf32>
      %585 = arith.subf %570, %584 : vector<8x128xf32>
      %cst_163 = arith.constant 9.99999974E-6 : f32
      %586 = vector.broadcast %cst_163 : f32 to vector<1x128xf32>
      %587 = arith.addf %583, %586 : vector<1x128xf32>
      %588 = math.rsqrt %587 : vector<1x128xf32>
      %589 = vector.broadcast %588 : vector<1x128xf32> to vector<8x128xf32>
      %590 = arith.mulf %585, %589 : vector<8x128xf32>
      %cst_164 = arith.constant 0.000000e+00 : f32
      %591 = vector.broadcast %cst_164 : f32 to vector<8x128xf32>
      %592 = arith.maximumf %590, %591 : vector<8x128xf32>
      %c0_165 = arith.constant 0 : index
      %c0_166 = arith.constant 0 : index
      %593 = vector.load %arg7[%c0_165, %c0_166] : memref<8x128xf32, #tpu.memory_space<vmem>>, vector<8x128xf32>
      tpu.vector_store %arg7[%c0_165, %c0_166], %592 {strides = array<i32>} : memref<8x128xf32, #tpu.memory_space<vmem>>, vector<8x128xf32>,
    } else {
    }
    return
  }
  func.func @transform_0(%arg0: i32) -> (i32, i32) {
    %c0_i32 = arith.constant 0 : i32
    %c0_i32_0 = arith.constant 0 : i32
    %c0_i32_1 = arith.constant 0 : i32
    return %c0_i32, %c0_i32_0 : i32, i32
  }
  func.func @transform_1(%arg0: i32) -> (i32, i32) {
    %c0_i32 = arith.constant 0 : i32
    %c0_i32_0 = arith.constant 0 : i32
    %c0_i32_1 = arith.constant 0 : i32
    return %c0_i32, %c0_i32_0 : i32, i32
  }
  func.func @transform_2(%arg0: i32) -> (i32, i32) {
    %c0_i32 = arith.constant 0 : i32
    %c0_i32_0 = arith.constant 0 : i32
    %c0_i32_1 = arith.constant 0 : i32
    return %c0_i32, %c0_i32_0 : i32, i32
  }
  func.func @transform_3(%arg0: i32) -> i32 {
    %c0_i32 = arith.constant 0 : i32
    %c0_i32_0 = arith.constant 0 : i32
    return %c0_i32 : i32
  }
  func.func @transform_4(%arg0: i32) -> (i32, i32) {
    %c0_i32 = arith.constant 0 : i32
    %c0_i32_0 = arith.constant 0 : i32
    return %arg0, %c0_i32 : i32, i32
  }
  func.func @transform_5(%arg0: i32) -> (i32, i32) {
    %c0_i32 = arith.constant 0 : i32
    %c0_i32_0 = arith.constant 0 : i32
    %c0_i32_1 = arith.constant 0 : i32
    return %c0_i32, %c0_i32_0 : i32, i32
  }
  func.func @transform_6(%arg0: i32) -> (i32, i32) {
    %c0_i32 = arith.constant 0 : i32
    %c0_i32_0 = arith.constant 0 : i32
    %c0_i32_1 = arith.constant 0 : i32
    return %c0_i32, %c0_i32_0 : i32, i32
  }
}

</mosaic_0001>

<llo_original>
// kernel: tpu_custom_call.1
$region0: #{tpu_custom_call.1}
  #allocation0 [shape = 'u32[]', space=smem, size = 0x4, offset = 0x4, fixed_abs, tag = 'smem constant byte address 0x4 - core index']
  #allocation1 [shape = 'u32[144,128]{1,0:T(1,128)}', space=vmem, size = 0x12000, scoped, tag = 'internal scratch']
  #allocation2 [shape = 'f32[2,8,128]{2,1,0:T(8,128)}', space=vmem, size = 0x2000, scoped, tag = 'scratch operand']
  #allocation3 [shape = 'f32[8,1024]{1,0:T(8,128)}', space=vmem, size = 0x8000, scoped, tag = 'scratch operand']
  %s0 = inlined_call_operand.vmem [shape: f32[8,128], index: 0, kind: input, shape index: {}]
  %s1 = inlined_call_operand.vmem [shape: f32[8,128], index: 1, kind: input, shape index: {}]
  %s2 = inlined_call_operand.vmem [shape: f32[16,6], index: 2, kind: input, shape index: {}]
  %s3 = inlined_call_operand.vmem [shape: f32[16], index: 3, kind: input, shape index: {}]
  %s4 = inlined_call_operand.hbm [shape: bf16[2048,128], index: 4, kind: input, shape index: {}]
  %s5 = inlined_call_operand.vmem [shape: f32[1,128], index: 5, kind: input, shape index: {}]
  %s6 = inlined_call_operand.hbm [shape: f32[8,128], index: 6, kind: output, shape index: {}]
  %s7 = sld [smem:[#allocation0]]
  $region77: #{tpu_custom_call.1} parent=0
    _
  %s9 = ssub.s32 1, %s7
  %s10 = scalar_select 0, %s9, %s7
  $region1: #{tpu_custom_call.1} parent=0
    #allocation4 [shape = 'u8[8192]{0}', space=smem, size = 0x2000, scoped, tag = 'input window, operand 2, single buffered']
    #allocation5 [shape = 's32[2]{0}', space=sflag, size = 0x8, scoped, tag = 'scoped memory for tpu_custom_call.1']
    #allocation6 [shape = 's32[2]{0}', space=sflag, size = 0x8, scoped, tag = 'scoped memory for tpu_custom_call.1']
    #allocation7 [shape = 's32[2]{0}', space=sflag, size = 0x8, scoped, tag = 'scoped memory for tpu_custom_call.1']
    #allocation8 [shape = 'u8[512]{0}', space=smem, size = 0x200, scoped, tag = 'input window, operand 3, single buffered']
    #allocation9 [shape = 's32[1]{0}', space=sflag, size = 0x4, scoped, tag = 'scoped memory for tpu_custom_call.1']
    #allocation10 [shape = 'u8[524288]{0}', space=vmem, size = 0x80000, scoped, tag = 'input window, operand 4']
    #allocation11 [shape = 'u8[4096]{0}', space=vmem, size = 0x1000, scoped, tag = 'output window, operand 0, single buffered']
    %11 = vsyncpa [#allocation7], 0
    %12 = vsyncpa [#allocation9], 0
    %13 = vsyncpa [#allocation5], 0
    %s14 = scalar_lea.sflag [#allocation5], 1
    %15 = vsyncpa %s14, 0
    %16 = vsyncpa [#allocation6], 0
    loop: start=0, step=1, limit=4
    $region2: #{tpu_custom_call.1} parent=1 // loop_pre_header
      _
    $region3: #{tpu_custom_call.1} parent=1 // loop_header
      %s18 = sphi 0, %s22
      %p19 = scmp.ge.s32.totalorder %s18, 4
      %s26 = sphi 0, %s26
      %s28 = sphi 0, %s26
      %s29 = sphi 0, %s28
      %s43 = sphi 0, %s29
      %s47 = sphi 0, %s47
      %s49 = sphi 0, %s47
      %s50 = sphi 0, %s49
      %s64 = sphi 0, %s50
      %s68 = sphi 0, %s68
      %s70 = sphi 0, %s68
      %s71 = sphi 0, %s70
      %s85 = sphi 0, %s71
      %s89 = sphi 0, %s89
      %s91 = sphi 0, %s89
      %s92 = sphi 0, %s91
      %s106 = sphi 0, %s92
      %s112 = sphi 0, %s114
      %s115 = sphi 0, %s112
      %s116 = sphi 0, %s115
      %s132 = sphi 0, %s116
      %s136 = sphi 0, %s136
      %s138 = sphi 0, %s136
      %s139 = sphi 0, %s138
      %s153 = sphi 0, %s139
      %s157 = sphi 0, %s157
      %s159 = sphi 0, %s157
      %s160 = sphi 0, %s159
      %s174 = sphi 0, %s160
    $region4: #{tpu_custom_call.1} parent=1 // loop_header_branch
      %21 = sbr.rel (%p19) target = $region8
    $region5: #{tpu_custom_call.1} parent=1 // loop_body
      %s23 = ssub.s32 %s18, 1
      %s24 = ssub.s32 %s18, 2
      %s25 = sadd.s32 %s18, 1
      %s27 = sadd.s32 %s26, 1
      %p30 = scmp.eq.s32.totalorder %s18, 1
      %p31 = scmp.ne.s32.totalorder %s26, %s28
      %p32 = scmp.eq.s32.totalorder %s18, 0
      %p33 = por %p31, %p32
      %p34 = scmp.ne.s32.totalorder %s26, %s28
      %p35 = scmp.eq.s32.totalorder %s23, 1
      %p36 = por %p34, %p35
      %p37 = scmp.ne.s32.totalorder %s28, %s29
      %p38 = scmp.eq.s32.totalorder %s23, 0
      %p39 = por %p37, %p38
      %p40 = scmp.ne.s32.totalorder %s28, %s29
      %p41 = scmp.eq.s32.totalorder %s24, 1
      %p42 = por %p40, %p41
      %p44 = scmp.ne.s32.totalorder %s29, %s43
      %p45 = scmp.eq.s32.totalorder %s24, 0
      %p46 = por %p44, %p45
      %s48 = sadd.s32 %s47, 1
      %p51 = scmp.eq.s32.totalorder %s18, 1
      %p52 = scmp.ne.s32.totalorder %s47, %s49
      %p53 = scmp.eq.s32.totalorder %s18, 0
      %p54 = por %p52, %p53
      %p55 = scmp.ne.s32.totalorder %s47, %s49
      %p56 = scmp.eq.s32.totalorder %s23, 1
      %p57 = por %p55, %p56
      %p58 = scmp.ne.s32.totalorder %s49, %s50
      %p59 = scmp.eq.s32.totalorder %s23, 0
      %p60 = por %p58, %p59
      %p61 = scmp.ne.s32.totalorder %s49, %s50
      %p62 = scmp.eq.s32.totalorder %s24, 1
      %p63 = por %p61, %p62
      %p65 = scmp.ne.s32.totalorder %s50, %s64
      %p66 = scmp.eq.s32.totalorder %s24, 0
      %p67 = por %p65, %p66
      %s69 = sadd.s32 %s68, 1
      %p72 = scmp.eq.s32.totalorder %s18, 1
      %p73 = scmp.ne.s32.totalorder %s68, %s70
      %p74 = scmp.eq.s32.totalorder %s18, 0
      %p75 = por %p73, %p74
      %p76 = scmp.ne.s32.totalorder %s68, %s70
      %p77 = scmp.eq.s32.totalorder %s23, 1
      %p78 = por %p76, %p77
      %p79 = scmp.ne.s32.totalorder %s70, %s71
      %p80 = scmp.eq.s32.totalorder %s23, 0
      %p81 = por %p79, %p80
      %p82 = scmp.ne.s32.totalorder %s70, %s71
      %p83 = scmp.eq.s32.totalorder %s24, 1
      %p84 = por %p82, %p83
      %p86 = scmp.ne.s32.totalorder %s71, %s85
      %p87 = scmp.eq.s32.totalorder %s24, 0
      %p88 = por %p86, %p87
      %s90 = sadd.s32 %s89, 1
      %p93 = scmp.eq.s32.totalorder %s18, 1
      %p94 = scmp.ne.s32.totalorder %s89, %s91
      %p95 = scmp.eq.s32.totalorder %s18, 0
      %p96 = por %p94, %p95
      %p97 = scmp.ne.s32.totalorder %s89, %s91
      %p98 = scmp.eq.s32.totalorder %s23, 1
      %p99 = por %p97, %p98
      %p100 = scmp.ne.s32.totalorder %s91, %s92
      %p101 = scmp.eq.s32.totalorder %s23, 0
      %p102 = por %p100, %p101
      %p103 = scmp.ne.s32.totalorder %s91, %s92
      %p104 = scmp.eq.s32.totalorder %s24, 1
      %p105 = por %p103, %p104
      %p107 = scmp.ne.s32.totalorder %s92, %s106
      %p108 = scmp.eq.s32.totalorder %s24, 0
      %p109 = por %p107, %p108
      %s110 = ssub.s32 %s18, %s25
      %p111 = scmp.eq.s32.totalorder %s110, 0
      %s113 = sadd.s32 %s112, 1
      %s114 = scalar_select %p111, %s112, %s113
      %p117 = pneg %p111
      %p118 = scmp.eq.s32.totalorder %s18, 1
      %p119 = por %p117, %p118
      %p120 = scmp.ne.s32.totalorder %s112, %s115
      %p121 = scmp.eq.s32.totalorder %s18, 0
      %p122 = por %p120, %p121
      %p123 = scmp.ne.s32.totalorder %s112, %s115
      %p124 = scmp.eq.s32.totalorder %s23, 1
      %p125 = por %p123, %p124
      %p126 = scmp.ne.s32.totalorder %s115, %s116
      %p127 = scmp.eq.s32.totalorder %s23, 0
      %p128 = por %p126, %p127
      %p129 = scmp.ne.s32.totalorder %s115, %s116
      %p130 = scmp.eq.s32.totalorder %s24, 1
      %p131 = por %p129, %p130
      %p133 = scmp.ne.s32.totalorder %s116, %s132
      %p134 = scmp.eq.s32.totalorder %s24, 0
      %p135 = por %p133, %p134
      %s137 = sadd.s32 %s136, 1
      %p140 = scmp.eq.s32.totalorder %s18, 1
      %p141 = scmp.ne.s32.totalorder %s136, %s138
      %p142 = scmp.eq.s32.totalorder %s18, 0
      %p143 = por %p141, %p142
      %p144 = scmp.ne.s32.totalorder %s136, %s138
      %p145 = scmp.eq.s32.totalorder %s23, 1
      %p146 = por %p144, %p145
      %p147 = scmp.ne.s32.totalorder %s138, %s139
      %p148 = scmp.eq.s32.totalorder %s23, 0
      %p149 = por %p147, %p148
      %p150 = scmp.ne.s32.totalorder %s138, %s139
      %p151 = scmp.eq.s32.totalorder %s24, 1
      %p152 = por %p150, %p151
      %p154 = scmp.ne.s32.totalorder %s139, %s153
      %p155 = scmp.eq.s32.totalorder %s24, 0
      %p156 = por %p154, %p155
      %s158 = sadd.s32 %s157, 1
      %p161 = scmp.eq.s32.totalorder %s18, 1
      %p162 = scmp.ne.s32.totalorder %s157, %s159
      %p163 = scmp.eq.s32.totalorder %s18, 0
      %p164 = por %p162, %p163
      %p165 = scmp.ne.s32.totalorder %s157, %s159
      %p166 = scmp.eq.s32.totalorder %s23, 1
      %p167 = por %p165, %p166
      %p168 = scmp.ne.s32.totalorder %s159, %s160
      %p169 = scmp.eq.s32.totalorder %s23, 0
      %p170 = por %p168, %p169
      %p171 = scmp.ne.s32.totalorder %s159, %s160
      %p172 = scmp.eq.s32.totalorder %s24, 1
      %p173 = por %p171, %p172
      %p175 = scmp.ne.s32.totalorder %s160, %s174
      %p176 = scmp.eq.s32.totalorder %s24, 0
      %p177 = por %p175, %p176
      %p178 = scmp.le.s32.totalorder 1, %s18
      %p179 = scmp.lt.s32.totalorder %s18, 3
      %p180 = pnand %p178, %p179
      %p181 = pneg %p180
      // Predicated region
      $region9: #{tpu_custom_call.1} parent=5 // pred_check
        _
      $region10: #{tpu_custom_call.1} parent=5 // pred_check_branch
        %183 = sbr.rel (%p180) target = $region12
      $region11: #{tpu_custom_call.1} parent=5 // pred_region
        %s184 = ssub.s32 %s18, 1
        // Predicated region
        $region13: #{tpu_custom_call.1} parent=11 // pred_check
          %p185 = pneg %p39
        $region14: #{tpu_custom_call.1} parent=11 // pred_check_branch
          %187 = sbr.rel (%p185) target = $region16
        $region15: #{tpu_custom_call.1} parent=11 // pred_region
          _
        $region16: #{tpu_custom_call.1} parent=11 // pred_fallthru
          _
        // Predicated region
        $region17: #{tpu_custom_call.1} parent=11 // pred_check
          %p188 = pneg %p60
        $region18: #{tpu_custom_call.1} parent=11 // pred_check_branch
          %190 = sbr.rel (%p188) target = $region20
        $region19: #{tpu_custom_call.1} parent=11 // pred_region
          _
        $region20: #{tpu_custom_call.1} parent=11 // pred_fallthru
          _
        // Predicated region
        $region21: #{tpu_custom_call.1} parent=11 // pred_check
          %p191 = pneg %p81
        $region22: #{tpu_custom_call.1} parent=11 // pred_check_branch
          %193 = sbr.rel (%p191) target = $region24
        $region23: #{tpu_custom_call.1} parent=11 // pred_region
          %s195 = ssub.s32 256, 256
          %196 = vsyncadd [#allocation7], %s195
          %s197 = sshll.u32 %s2, 4
          %s198 = int_to_ptr.vmem [resolvable:$true] %s197
          %203 = dma.vmem_to_smem %s198, 256, [#allocation4], [#allocation7], 128, 128, 8
        $region24: #{tpu_custom_call.1} parent=11 // pred_fallthru
          _
        // Predicated region
        $region25: #{tpu_custom_call.1} parent=11 // pred_check
          %p204 = pneg %p102
        $region26: #{tpu_custom_call.1} parent=11 // pred_check_branch
          %206 = sbr.rel (%p204) target = $region28
        $region27: #{tpu_custom_call.1} parent=11 // pred_region
          %s208 = ssub.s32 16, 16
          %209 = vsyncadd [#allocation9], %s208
          %s211 = sshll.u32 %s3, 4
          %s212 = int_to_ptr.vmem [resolvable:$true] %s211
          %214 = dma.vmem_to_smem %s212, 16, [#allocation8], [#allocation9]
        $region28: #{tpu_custom_call.1} parent=11 // pred_fallthru
          _
        // Predicated region
        $region29: #{tpu_custom_call.1} parent=11 // pred_check
          %p215 = pneg %p149
        $region30: #{tpu_custom_call.1} parent=11 // pred_check_branch
          %217 = sbr.rel (%p215) target = $region32
        $region31: #{tpu_custom_call.1} parent=11 // pred_region
          _
        $region32: #{tpu_custom_call.1} parent=11 // pred_fallthru
          _
      $region12: #{tpu_custom_call.1} parent=5 // pred_fallthru
        _
      %p218 = scmp.lt.s32.totalorder %s18, 2
      // Predicated region
      $region33: #{tpu_custom_call.1} parent=5 // pred_check
        %p219 = pneg %p218
      $region34: #{tpu_custom_call.1} parent=5 // pred_check_branch
        %221 = sbr.rel (%p219) target = $region36
      $region35: #{tpu_custom_call.1} parent=5 // pred_region
        // Predicated region
        $region37: #{tpu_custom_call.1} parent=35 // pred_check
          %p222 = pneg %p122
        $region38: #{tpu_custom_call.1} parent=35 // pred_check_branch
          %224 = sbr.rel (%p222) target = $region40
        $region39: #{tpu_custom_call.1} parent=35 // pred_region
          %s225 = sand.u32 %s112, 1
          %s226 = scalar_lea.sflag [#allocation5], %s225
          %s227 = sand.u32 %s112, 1
          %s228 = smul.addr %s227, 512
          %s229 = scalar_lea.vmem [#allocation10], %s228
          %s230 = smul.u32 128, %s18
          %s232 = ssub.s32 8192, 8192
          %233 = vsyncadd %s226, %s232
          %s234 = smul.addr %s230, 64
          %s235 = scalar_lea.hbm %s4, %s234
          %s236 = sshll.u32 %s229, 4
          %s237 = int_to_ptr.vmem [resolvable:$true] %s236
          %242 = dma.hbm_to_vmem [thread:$0]  %s235, 8192, %s237, %s226, 64, 64, 4
        $region40: #{tpu_custom_call.1} parent=35 // pred_fallthru
          _
      $region36: #{tpu_custom_call.1} parent=5 // pred_fallthru
        _
      %p243 = scmp.le.s32.totalorder 1, %s18
      %p244 = scmp.lt.s32.totalorder %s18, 3
      %p245 = pnand %p243, %p244
      %p246 = pneg %p245
      // Predicated region
      $region41: #{tpu_custom_call.1} parent=5 // pred_check
        _
      $region42: #{tpu_custom_call.1} parent=5 // pred_check_branch
        %248 = sbr.rel (%p245) target = $region44
      $region43: #{tpu_custom_call.1} parent=5 // pred_region
        %s249 = ssub.s32 %s18, 1
        // Predicated region
        $region45: #{tpu_custom_call.1} parent=43 // pred_check
          %p250 = pneg %p81
        $region46: #{tpu_custom_call.1} parent=43 // pred_check_branch
          %252 = sbr.rel (%p250) target = $region48
        $region47: #{tpu_custom_call.1} parent=43 // pred_region
          %253 = dma.done [#allocation7], 256
        $region48: #{tpu_custom_call.1} parent=43 // pred_fallthru
          _
        // Predicated region
        $region49: #{tpu_custom_call.1} parent=43 // pred_check
          %p254 = pneg %p102
        $region50: #{tpu_custom_call.1} parent=43 // pred_check_branch
          %256 = sbr.rel (%p254) target = $region52
        $region51: #{tpu_custom_call.1} parent=43 // pred_region
          %257 = dma.done [#allocation9], 16
        $region52: #{tpu_custom_call.1} parent=43 // pred_fallthru
          _
        %s258 = sand.u32 %s115, 1
        %s259 = scalar_lea.sflag [#allocation5], %s258
        %s260 = sand.u32 %s115, 1
        %s261 = smul.addr %s260, 512
        %s262 = scalar_lea.vmem [#allocation10], %s261
        // Predicated region
        $region53: #{tpu_custom_call.1} parent=43 // pred_check
          %p263 = pneg %p128
        $region54: #{tpu_custom_call.1} parent=43 // pred_check_branch
          %265 = sbr.rel (%p263) target = $region56
        $region55: #{tpu_custom_call.1} parent=43 // pred_region
          %266 = dma.done %s259, 8192
        $region56: #{tpu_custom_call.1} parent=43 // pred_fallthru
          _
        %267 = sfence
        %p268 = pneg %p39
        %p269 = pneg %p36
        %p270 = pneg %p60
        %p271 = pneg %p57
        %p272 = pneg %p81
        %p273 = pneg %p78
        %p274 = pneg %p102
        %p275 = pneg %p99
        %s276 = sand.u32 %s115, 1
        %s277 = scalar_lea.sflag [#allocation5], %s276
        %s278 = sand.u32 %s115, 1
        %s279 = smul.addr %s278, 512
        %s280 = scalar_lea.vmem [#allocation10], %s279
        %p281 = pneg %p128
        %p282 = pneg %p125
        %p283 = pneg %p149
        %p284 = pneg %p146
        %p285 = pneg %p170
        %p286 = pneg %p167
        %s287 = smul.u32 128, %s23
        %p289 = scmp.eq.s32.totalorder %s23, 0
        // Predicated region
        $region57: #{tpu_custom_call.1} parent=43 // pred_check
          %p290 = pneg %p289
        $region58: #{tpu_custom_call.1} parent=43 // pred_check_branch
          %292 = sbr.rel (%p290) target = $region60
        $region59: #{tpu_custom_call.1} parent=43 // pred_region
          %v293 = vld [vmem:[%s0] sm:$0xff]
          %v294 = vtanh.pop %v293
          %295 = vadd.xlane.f32.xlu0 %v294
          %v296 = vpop.xlane.xlu0 %295
          %v297 = vrot.slane %v296, 4
          %v298 = vadd.f32 %v296, %v297
          %v299 = vrot.slane %v298, 2
          %v300 = vadd.f32 %v298, %v299
          %v301 = vrot.slane %v300, 1
          %v302 = vadd.f32 %v300, %v301
          %s303 = vtos %v302
          %v304 = vstv %s303
          %v305 = vrcp.pop 1024.0
          %v306 = vmul.f32 %v304, %v305
          %v307 = vmul.f32 %v294, %v294
          %308 = vadd.xlane.f32.xlu0 %v307
          %v309 = vpop.xlane.xlu0 %308
          %v310 = vrot.slane %v309, 4
          %v311 = vadd.f32 %v309, %v310
          %v312 = vrot.slane %v311, 2
          %v313 = vadd.f32 %v311, %v312
          %v314 = vrot.slane %v313, 1
          %v315 = vadd.f32 %v313, %v314
          %s316 = vtos %v315
          %v317 = vstv %s316
          %v318 = vmul.f32 %v317, %v305
          %v319 = vmul.f32 %v306, %v306
          %v320 = vsub.f32 %v318, %v319
          %v321 = vmax.f32 %v320, 0.0
          %v322 = vsub.f32 %v294, %v306
          %v323 = vadd.f32 %v321, 1e-05
          %v324 = vrsqrt.pop %v323
          %v325 = vmul.f32 %v322, %v324
          %326 = vst [vmem:[#allocation2] sm:$0xff] %v325
          %v327 = vld [vmem:[%s1] sm:$0xff]
          %328 = vadd.xlane.f32.xlu0 %v327
          %v329 = vpop.xlane.xlu0 %328
          %v330 = vrot.slane %v329, 4
          %v331 = vadd.f32 %v329, %v330
          %v332 = vrot.slane %v331, 2
          %v333 = vadd.f32 %v331, %v332
          %v334 = vrot.slane %v333, 1
          %v335 = vadd.f32 %v333, %v334
          %s336 = vtos %v335
          %v337 = vstv %s336
          %v338 = vmul.f32 %v337, %v305
          %v339 = vmul.f32 %v327, %v327
          %340 = vadd.xlane.f32.xlu0 %v339
          %v341 = vpop.xlane.xlu0 %340
          %v342 = vrot.slane %v341, 4
          %v343 = vadd.f32 %v341, %v342
          %v344 = vrot.slane %v343, 2
          %v345 = vadd.f32 %v343, %v344
          %v346 = vrot.slane %v345, 1
          %v347 = vadd.f32 %v345, %v346
          %s348 = vtos %v347
          %v349 = vstv %s348
          %v350 = vmul.f32 %v349, %v305
          %v351 = vmul.f32 %v338, %v338
          %v352 = vsub.f32 %v350, %v351
          %v353 = vmax.f32 %v352, 0.0
          %v354 = vsub.f32 %v327, %v338
          %v355 = vadd.f32 %v353, 1e-05
          %v356 = vrsqrt.pop %v355
          %v357 = vmul.f32 %v354, %v356
          %s358 = scalar_lea.vmem [#allocation2], 8
          %359 = vst [vmem:[%s358] sm:$0xff] %v357
          %v360 = vld [vmem:[%s5] sm:$0x1]
          %v362 = vlaneseq
          %v363 = vshrl.u32 %v362, 7
          %v364 = vsub.s32 0, %v363
          %v365 = vrot.slane %v360, %v364
          %v367 = vadd.f32 %v365, 0.0
          %368 = vst [vmem:[#allocation11] sm:$0xff] %v367
        $region60: #{tpu_custom_call.1} parent=43 // pred_fallthru
          _
        %v369 = vld [vmem:[#allocation2] sm:$0xff]
        %370 = vrot.lane.b32.xlu0 %v369, 1
        %v371 = vpop.permute.xlu0 %370
        %v372 = vlaneseq
        %v373 = vand.u32 %v372, 127
        %vm374 = vcmp.ge.s32.totalorder %v373, 1
        %v375 = vsel %vm374, %v371, 0.0
        %376 = vrot.lane.b32.xlu0 %v369, 127
        %v377 = vpop.permute.xlu0 %376
        %vm378 = vcmp.lt.s32.totalorder %v373, 127
        %v379 = vsel %vm378, %v377, 0.0
        %s380 = scalar_lea.vmem [#allocation2], 8
        %v381 = vld [vmem:[%s380] sm:$0xff]
        %382 = vrot.lane.b32.xlu0 %v381, 1
        %v383 = vpop.permute.xlu0 %382
        %v384 = vsel %vm374, %v383, 0.0
        %385 = vrot.lane.b32.xlu0 %v381, 127
        %v386 = vpop.permute.xlu0 %385
        %v387 = vsel %vm378, %v386, 0.0
        %s388 = smul.u32 %s23, 8
        %s389 = sld [smem:[#allocation8 + %s388]]
        %v390 = vstv %s389
        %v391 = vadd.f32 %v390, 0.0
        %s392 = smul.u32 %s388, 128
        %s393 = sld [smem:[#allocation4 + %s392]]
        %v394 = vstv %s393
        %v395 = vmul.f32 %v375, %v394
        %v396 = vadd.f32 %v391, %v395
        %s397 = sadd.s32 %s392, 1
        %s398 = sld [smem:[#allocation4 + %s397]]
        %v399 = vstv %s398
        %v400 = vmul.f32 %v369, %v399
        %v401 = vadd.f32 %v396, %v400
        %s402 = sadd.s32 %s392, 2
        %s403 = sld [smem:[#allocation4 + %s402]]
        %v404 = vstv %s403
        %v405 = vmul.f32 %v379, %v404
        %v406 = vadd.f32 %v401, %v405
        %s407 = sadd.s32 %s392, 3
        %s408 = sld [smem:[#allocation4 + %s407]]
        %v409 = vstv %s408
        %v410 = vmul.f32 %v384, %v409
        %v411 = vadd.f32 %v406, %v410
        %s412 = sadd.s32 %s392, 4
        %s413 = sld [smem:[#allocation4 + %s412]]
        %v414 = vstv %s413
        %v415 = vmul.f32 %v381, %v414
        %v416 = vadd.f32 %v411, %v415
        %s417 = sadd.s32 %s392, 5
        %s418 = sld [smem:[#allocation4 + %s417]]
        %v419 = vstv %s418
        %v420 = vmul.f32 %v387, %v419
        %v421 = vadd.f32 %v416, %v420
        %422 = vadd.xlane.f32.xlu0 %v421
        %v423 = vpop.xlane.xlu0 %422
        %v424 = vrot.slane %v423, 4
        %v425 = vadd.f32 %v423, %v424
        %v426 = vrot.slane %v425, 2
        %v427 = vadd.f32 %v425, %v426
        %v428 = vrot.slane %v427, 1
        %v429 = vadd.f32 %v427, %v428
        %s430 = vtos %v429
        %v431 = vstv %s430
        %v432 = vrcp.pop 1024.0
        %v433 = vmul.f32 %v431, %v432
        %v434 = vmul.f32 %v421, %v421
        %435 = vadd.xlane.f32.xlu0 %v434
        %v436 = vpop.xlane.xlu0 %435
        %v437 = vrot.slane %v436, 4
        %v438 = vadd.f32 %v436, %v437
        %v439 = vrot.slane %v438, 2
        %v440 = vadd.f32 %v438, %v439
        %v441 = vrot.slane %v440, 1
        %v442 = vadd.f32 %v440, %v441
        %s443 = vtos %v442
        %v444 = vstv %s443
        %v445 = vmul.f32 %v444, %v432
        %v446 = vmul.f32 %v433, %v433
        %v447 = vsub.f32 %v445, %v446
        %v448 = vmax.f32 %v447, 0.0
        %v449 = vsub.f32 %v421, %v433
        %v450 = vadd.f32 %v448, 1e-05
        %v451 = vrsqrt.pop %v450
        %v452 = vmul.f32 %v449, %v451
        %v453 = vmax.f32 %v452, 0.0
        %454 = vst [vmem:[#allocation3] sm:$0xff] %v453
        %s455 = sadd.s32 %s388, 1
        %s456 = sld [smem:[#allocation8 + %s455]]
        %v457 = vstv %s456
        %v458 = vadd.f32 %v457, 0.0
        %s459 = smul.u32 %s455, 128
        %s460 = sld [smem:[#allocation4 + %s459]]
        %v461 = vstv %s460
        %v462 = vmul.f32 %v375, %v461
        %v463 = vadd.f32 %v458, %v462
        %s464 = sadd.s32 %s459, 1
        %s465 = sld [smem:[#allocation4 + %s464]]
        %v466 = vstv %s465
        %v467 = vmul.f32 %v369, %v466
        %v468 = vadd.f32 %v463, %v467
        %s469 = sadd.s32 %s459, 2
        %s470 = sld [smem:[#allocation4 + %s469]]
        %v471 = vstv %s470
        %v472 = vmul.f32 %v379, %v471
        %v473 = vadd.f32 %v468, %v472
        %s474 = sadd.s32 %s459, 3
        %s475 = sld [smem:[#allocation4 + %s474]]
        %v476 = vstv %s475
        %v477 = vmul.f32 %v384, %v476
        %v478 = vadd.f32 %v473, %v477
        %s479 = sadd.s32 %s459, 4
        %s480 = sld [smem:[#allocation4 + %s479]]
        %v481 = vstv %s480
        %v482 = vmul.f32 %v381, %v481
        %v483 = vadd.f32 %v478, %v482
        %s484 = sadd.s32 %s459, 5
        %s485 = sld [smem:[#allocation4 + %s484]]
        %v486 = vstv %s485
        %v487 = vmul.f32 %v387, %v486
        %v488 = vadd.f32 %v483, %v487
        %489 = vadd.xlane.f32.xlu0 %v488
        %v490 = vpop.xlane.xlu0 %489
        %v491 = vrot.slane %v490, 4
        %v492 = vadd.f32 %v490, %v491
        %v493 = vrot.slane %v492, 2
        %v494 = vadd.f32 %v492, %v493
        %v495 = vrot.slane %v494, 1
        %v496 = vadd.f32 %v494, %v495
        %s497 = vtos %v496
        %v498 = vstv %s497
        %v499 = vmul.f32 %v498, %v432
        %v500 = vmul.f32 %v488, %v488
        %501 = vadd.xlane.f32.xlu0 %v500
        %v502 = vpop.xlane.xlu0 %501
        %v503 = vrot.slane %v502, 4
        %v504 = vadd.f32 %v502, %v503
        %v505 = vrot.slane %v504, 2
        %v506 = vadd.f32 %v504, %v505
        %v507 = vrot.slane %v506, 1
        %v508 = vadd.f32 %v506, %v507
        %s509 = vtos %v508
        %v510 = vstv %s509
        %v511 = vmul.f32 %v510, %v432
        %v512 = vmul.f32 %v499, %v499
        %v513 = vsub.f32 %v511, %v512
        %v514 = vmax.f32 %v513, 0.0
        %v515 = vsub.f32 %v488, %v499
        %v516 = vadd.f32 %v514, 1e-05
        %v517 = vrsqrt.pop %v516
        %v518 = vmul.f32 %v515, %v517
        %v519 = vmax.f32 %v518, 0.0
        %520 = vst [vmem:[#allocation3 + $0x8] sm:$0xff] %v519
        %s521 = sadd.s32 %s388, 2
        %s522 = sld [smem:[#allocation8 + %s521]]
        %v523 = vstv %s522
        %v524 = vadd.f32 %v523, 0.0
        %s525 = smul.u32 %s521, 128
        %s526 = sld [smem:[#allocation4 + %s525]]
        %v527 = vstv %s526
        %v528 = vmul.f32 %v375, %v527
        %v529 = vadd.f32 %v524, %v528
        %s530 = sadd.s32 %s525, 1
        %s531 = sld [smem:[#allocation4 + %s530]]
        %v532 = vstv %s531
        %v533 = vmul.f32 %v369, %v532
        %v534 = vadd.f32 %v529, %v533
        %s535 = sadd.s32 %s525, 2
        %s536 = sld [smem:[#allocation4 + %s535]]
        %v537 = vstv %s536
        %v538 = vmul.f32 %v379, %v537
        %v539 = vadd.f32 %v534, %v538
        %s540 = sadd.s32 %s525, 3
        %s541 = sld [smem:[#allocation4 + %s540]]
        %v542 = vstv %s541
        %v543 = vmul.f32 %v384, %v542
        %v544 = vadd.f32 %v539, %v543
        %s545 = sadd.s32 %s525, 4
        %s546 = sld [smem:[#allocation4 + %s545]]
        %v547 = vstv %s546
        %v548 = vmul.f32 %v381, %v547
        %v549 = vadd.f32 %v544, %v548
        %s550 = sadd.s32 %s525, 5
        %s551 = sld [smem:[#allocation4 + %s550]]
        %v552 = vstv %s551
        %v553 = vmul.f32 %v387, %v552
        %v554 = vadd.f32 %v549, %v553
        %555 = vadd.xlane.f32.xlu0 %v554
        %v556 = vpop.xlane.xlu0 %555
        %v557 = vrot.slane %v556, 4
        %v558 = vadd.f32 %v556, %v557
        %v559 = vrot.slane %v558, 2
        %v560 = vadd.f32 %v558, %v559
        %v561 = vrot.slane %v560, 1
        %v562 = vadd.f32 %v560, %v561
        %s563 = vtos %v562
        %v564 = vstv %s563
        %v565 = vmul.f32 %v564, %v432
        %v566 = vmul.f32 %v554, %v554
        %567 = vadd.xlane.f32.xlu0 %v566
        %v568 = vpop.xlane.xlu0 %567
        %v569 = vrot.slane %v568, 4
        %v570 = vadd.f32 %v568, %v569
        %v571 = vrot.slane %v570, 2
        %v572 = vadd.f32 %v570, %v571
        %v573 = vrot.slane %v572, 1
        %v574 = vadd.f32 %v572, %v573
        %s575 = vtos %v574
        %v576 = vstv %s575
        %v577 = vmul.f32 %v576, %v432
        %v578 = vmul.f32 %v565, %v565
        %v579 = vsub.f32 %v577, %v578
        %v580 = vmax.f32 %v579, 0.0
        %v581 = vsub.f32 %v554, %v565
        %v582 = vadd.f32 %v580, 1e-05
        %v583 = vrsqrt.pop %v582
        %v584 = vmul.f32 %v581, %v583
        %v585 = vmax.f32 %v584, 0.0
        %586 = vst [vmem:[#allocation3 + $0x10] sm:$0xff] %v585
        %s587 = sadd.s32 %s388, 3
        %s588 = sld [smem:[#allocation8 + %s587]]
        %v589 = vstv %s588
        %v590 = vadd.f32 %v589, 0.0
        %s591 = smul.u32 %s587, 128
        %s592 = sld [smem:[#allocation4 + %s591]]
        %v593 = vstv %s592
        %v594 = vmul.f32 %v375, %v593
        %v595 = vadd.f32 %v590, %v594
        %s596 = sadd.s32 %s591, 1
        %s597 = sld [smem:[#allocation4 + %s596]]
        %v598 = vstv %s597
        %v599 = vmul.f32 %v369, %v598
        %v600 = vadd.f32 %v595, %v599
        %s601 = sadd.s32 %s591, 2
        %s602 = sld [smem:[#allocation4 + %s601]]
        %v603 = vstv %s602
        %v604 = vmul.f32 %v379, %v603
        %v605 = vadd.f32 %v600, %v604
        %s606 = sadd.s32 %s591, 3
        %s607 = sld [smem:[#allocation4 + %s606]]
        %v608 = vstv %s607
        %v609 = vmul.f32 %v384, %v608
        %v610 = vadd.f32 %v605, %v609
        %s611 = sadd.s32 %s591, 4
        %s612 = sld [smem:[#allocation4 + %s611]]
        %v613 = vstv %s612
        %v614 = vmul.f32 %v381, %v613
        %v615 = vadd.f32 %v610, %v614
        %s616 = sadd.s32 %s591, 5
        %s617 = sld [smem:[#allocation4 + %s616]]
        %v618 = vstv %s617
        %v619 = vmul.f32 %v387, %v618
        %v620 = vadd.f32 %v615, %v619
        %621 = vadd.xlane.f32.xlu0 %v620
        %v622 = vpop.xlane.xlu0 %621
        %v623 = vrot.slane %v622, 4
        %v624 = vadd.f32 %v622, %v623
        %v625 = vrot.slane %v624, 2
        %v626 = vadd.f32 %v624, %v625
        %v627 = vrot.slane %v626, 1
        %v628 = vadd.f32 %v626, %v627
        %s629 = vtos %v628
        %v630 = vstv %s629
        %v631 = vmul.f32 %v630, %v432
        %v632 = vmul.f32 %v620, %v620
        %633 = vadd.xlane.f32.xlu0 %v632
        %v634 = vpop.xlane.xlu0 %633
        %v635 = vrot.slane %v634, 4
        %v636 = vadd.f32 %v634, %v635
        %v637 = vrot.slane %v636, 2
        %v638 = vadd.f32 %v636, %v637
        %v639 = vrot.slane %v638, 1
        %v640 = vadd.f32 %v638, %v639
        %s641 = vtos %v640
        %v642 = vstv %s641
        %v643 = vmul.f32 %v642, %v432
        %v644 = vmul.f32 %v631, %v631
        %v645 = vsub.f32 %v643, %v644
        %v646 = vmax.f32 %v645, 0.0
        %v647 = vsub.f32 %v620, %v631
        %v648 = vadd.f32 %v646, 1e-05
        %v649 = vrsqrt.pop %v648
        %v650 = vmul.f32 %v647, %v649
        %v651 = vmax.f32 %v650, 0.0
        %652 = vst [vmem:[#allocation3 + $0x18] sm:$0xff] %v651
        %s653 = sadd.s32 %s388, 4
        %s654 = sld [smem:[#allocation8 + %s653]]
        %v655 = vstv %s654
        %v656 = vadd.f32 %v655, 0.0
        %s657 = smul.u32 %s653, 128
        %s658 = sld [smem:[#allocation4 + %s657]]
        %v659 = vstv %s658
        %v660 = vmul.f32 %v375, %v659
        %v661 = vadd.f32 %v656, %v660
        %s662 = sadd.s32 %s657, 1
        %s663 = sld [smem:[#allocation4 + %s662]]
        %v664 = vstv %s663
        %v665 = vmul.f32 %v369, %v664
        %v666 = vadd.f32 %v661, %v665
        %s667 = sadd.s32 %s657, 2
        %s668 = sld [smem:[#allocation4 + %s667]]
        %v669 = vstv %s668
        %v670 = vmul.f32 %v379, %v669
        %v671 = vadd.f32 %v666, %v670
        %s672 = sadd.s32 %s657, 3
        %s673 = sld [smem:[#allocation4 + %s672]]
        %v674 = vstv %s673
        %v675 = vmul.f32 %v384, %v674
        %v676 = vadd.f32 %v671, %v675
        %s677 = sadd.s32 %s657, 4
        %s678 = sld [smem:[#allocation4 + %s677]]
        %v679 = vstv %s678
        %v680 = vmul.f32 %v381, %v679
        %v681 = vadd.f32 %v676, %v680
        %s682 = sadd.s32 %s657, 5
        %s683 = sld [smem:[#allocation4 + %s682]]
        %v684 = vstv %s683
        %v685 = vmul.f32 %v387, %v684
        %v686 = vadd.f32 %v681, %v685
        %687 = vadd.xlane.f32.xlu0 %v686
        %v688 = vpop.xlane.xlu0 %687
        %v689 = vrot.slane %v688, 4
        %v690 = vadd.f32 %v688, %v689
        %v691 = vrot.slane %v690, 2
        %v692 = vadd.f32 %v690, %v691
        %v693 = vrot.slane %v692, 1
        %v694 = vadd.f32 %v692, %v693
        %s695 = vtos %v694
        %v696 = vstv %s695
        %v697 = vmul.f32 %v696, %v432
        %v698 = vmul.f32 %v686, %v686
        %699 = vadd.xlane.f32.xlu0 %v698
        %v700 = vpop.xlane.xlu0 %699
        %v701 = vrot.slane %v700, 4
        %v702 = vadd.f32 %v700, %v701
        %v703 = vrot.slane %v702, 2
        %v704 = vadd.f32 %v702, %v703
        %v705 = vrot.slane %v704, 1
        %v706 = vadd.f32 %v704, %v705
        %s707 = vtos %v706
        %v708 = vstv %s707
        %v709 = vmul.f32 %v708, %v432
        %v710 = vmul.f32 %v697, %v697
        %v711 = vsub.f32 %v709, %v710
        %v712 = vmax.f32 %v711, 0.0
        %v713 = vsub.f32 %v686, %v697
        %v714 = vadd.f32 %v712, 1e-05
        %v715 = vrsqrt.pop %v714
        %v716 = vmul.f32 %v713, %v715
        %v717 = vmax.f32 %v716, 0.0
        %718 = vst [vmem:[#allocation3 + $0x20] sm:$0xff] %v717
        %s719 = sadd.s32 %s388, 5
        %s720 = sld [smem:[#allocation8 + %s719]]
        %v721 = vstv %s720
        %v722 = vadd.f32 %v721, 0.0
        %s723 = smul.u32 %s719, 128
        %s724 = sld [smem:[#allocation4 + %s723]]
        %v725 = vstv %s724
        %v726 = vmul.f32 %v375, %v725
        %v727 = vadd.f32 %v722, %v726
        %s728 = sadd.s32 %s723, 1
        %s729 = sld [smem:[#allocation4 + %s728]]
        %v730 = vstv %s729
        %v731 = vmul.f32 %v369, %v730
        %v732 = vadd.f32 %v727, %v731
        %s733 = sadd.s32 %s723, 2
        %s734 = sld [smem:[#allocation4 + %s733]]
        %v735 = vstv %s734
        %v736 = vmul.f32 %v379, %v735
        %v737 = vadd.f32 %v732, %v736
        %s738 = sadd.s32 %s723, 3
        %s739 = sld [smem:[#allocation4 + %s738]]
        %v740 = vstv %s739
        %v741 = vmul.f32 %v384, %v740
        %v742 = vadd.f32 %v737, %v741
        %s743 = sadd.s32 %s723, 4
        %s744 = sld [smem:[#allocation4 + %s743]]
        %v745 = vstv %s744
        %v746 = vmul.f32 %v381, %v745
        %v747 = vadd.f32 %v742, %v746
        %s748 = sadd.s32 %s723, 5
        %s749 = sld [smem:[#allocation4 + %s748]]
        %v750 = vstv %s749
        %v751 = vmul.f32 %v387, %v750
        %v752 = vadd.f32 %v747, %v751
        %753 = vadd.xlane.f32.xlu0 %v752
        %v754 = vpop.xlane.xlu0 %753
        %v755 = vrot.slane %v754, 4
        %v756 = vadd.f32 %v754, %v755
        %v757 = vrot.slane %v756, 2
        %v758 = vadd.f32 %v756, %v757
        %v759 = vrot.slane %v758, 1
        %v760 = vadd.f32 %v758, %v759
        %s761 = vtos %v760
        %v762 = vstv %s761
        %v763 = vmul.f32 %v762, %v432
        %v764 = vmul.f32 %v752, %v752
        %765 = vadd.xlane.f32.xlu0 %v764
        %v766 = vpop.xlane.xlu0 %765
        %v767 = vrot.slane %v766, 4
        %v768 = vadd.f32 %v766, %v767
        %v769 = vrot.slane %v768, 2
        %v770 = vadd.f32 %v768, %v769
        %v771 = vrot.slane %v770, 1
        %v772 = vadd.f32 %v770, %v771
        %s773 = vtos %v772
        %v774 = vstv %s773
        %v775 = vmul.f32 %v774, %v432
        %v776 = vmul.f32 %v763, %v763
        %v777 = vsub.f32 %v775, %v776
        %v778 = vmax.f32 %v777, 0.0
        %v779 = vsub.f32 %v752, %v763
        %v780 = vadd.f32 %v778, 1e-05
        %v781 = vrsqrt.pop %v780
        %v782 = vmul.f32 %v779, %v781
        %v783 = vmax.f32 %v782, 0.0
        %784 = vst [vmem:[#allocation3 + $0x28] sm:$0xff] %v783
        %s785 = sadd.s32 %s388, 6
        %s786 = sld [smem:[#allocation8 + %s785]]
        %v787 = vstv %s786
        %v788 = vadd.f32 %v787, 0.0
        %s789 = smul.u32 %s785, 128
        %s790 = sld [smem:[#allocation4 + %s789]]
        %v791 = vstv %s790
        %v792 = vmul.f32 %v375, %v791
        %v793 = vadd.f32 %v788, %v792
        %s794 = sadd.s32 %s789, 1
        %s795 = sld [smem:[#allocation4 + %s794]]
        %v796 = vstv %s795
        %v797 = vmul.f32 %v369, %v796
        %v798 = vadd.f32 %v793, %v797
        %s799 = sadd.s32 %s789, 2
        %s800 = sld [smem:[#allocation4 + %s799]]
        %v801 = vstv %s800
        %v802 = vmul.f32 %v379, %v801
        %v803 = vadd.f32 %v798, %v802
        %s804 = sadd.s32 %s789, 3
        %s805 = sld [smem:[#allocation4 + %s804]]
        %v806 = vstv %s805
        %v807 = vmul.f32 %v384, %v806
        %v808 = vadd.f32 %v803, %v807
        %s809 = sadd.s32 %s789, 4
        %s810 = sld [smem:[#allocation4 + %s809]]
        %v811 = vstv %s810
        %v812 = vmul.f32 %v381, %v811
        %v813 = vadd.f32 %v808, %v812
        %s814 = sadd.s32 %s789, 5
        %s815 = sld [smem:[#allocation4 + %s814]]
        %v816 = vstv %s815
        %v817 = vmul.f32 %v387, %v816
        %v818 = vadd.f32 %v813, %v817
        %819 = vadd.xlane.f32.xlu0 %v818
        %v820 = vpop.xlane.xlu0 %819
        %v821 = vrot.slane %v820, 4
        %v822 = vadd.f32 %v820, %v821
        %v823 = vrot.slane %v822, 2
        %v824 = vadd.f32 %v822, %v823
        %v825 = vrot.slane %v824, 1
        %v826 = vadd.f32 %v824, %v825
        %s827 = vtos %v826
        %v828 = vstv %s827
        %v829 = vmul.f32 %v828, %v432
        %v830 = vmul.f32 %v818, %v818
        %831 = vadd.xlane.f32.xlu0 %v830
        %v832 = vpop.xlane.xlu0 %831
        %v833 = vrot.slane %v832, 4
        %v834 = vadd.f32 %v832, %v833
        %v835 = vrot.slane %v834, 2
        %v836 = vadd.f32 %v834, %v835
        %v837 = vrot.slane %v836, 1
        %v838 = vadd.f32 %v836, %v837
        %s839 = vtos %v838
        %v840 = vstv %s839
        %v841 = vmul.f32 %v840, %v432
        %v842 = vmul.f32 %v829, %v829
        %v843 = vsub.f32 %v841, %v842
        %v844 = vmax.f32 %v843, 0.0
        %v845 = vsub.f32 %v818, %v829
        %v846 = vadd.f32 %v844, 1e-05
        %v847 = vrsqrt.pop %v846
        %v848 = vmul.f32 %v845, %v847
        %v849 = vmax.f32 %v848, 0.0
        %850 = vst [vmem:[#allocation3 + $0x30] sm:$0xff] %v849
        %s851 = sadd.s32 %s388, 7
        %s852 = sld [smem:[#allocation8 + %s851]]
        %v853 = vstv %s852
        %v854 = vadd.f32 %v853, 0.0
        %s855 = smul.u32 %s851, 128
        %s856 = sld [smem:[#allocation4 + %s855]]
        %v857 = vstv %s856
        %v858 = vmul.f32 %v375, %v857
        %v859 = vadd.f32 %v854, %v858
        %s860 = sadd.s32 %s855, 1
        %s861 = sld [smem:[#allocation4 + %s860]]
        %v862 = vstv %s861
        %v863 = vmul.f32 %v369, %v862
        %v864 = vadd.f32 %v859, %v863
        %s865 = sadd.s32 %s855, 2
        %s866 = sld [smem:[#allocation4 + %s865]]
        %v867 = vstv %s866
        %v868 = vmul.f32 %v379, %v867
        %v869 = vadd.f32 %v864, %v868
        %s870 = sadd.s32 %s855, 3
        %s871 = sld [smem:[#allocation4 + %s870]]
        %v872 = vstv %s871
        %v873 = vmul.f32 %v384, %v872
        %v874 = vadd.f32 %v869, %v873
        %s875 = sadd.s32 %s855, 4
        %s876 = sld [smem:[#allocation4 + %s875]]
        %v877 = vstv %s876
        %v878 = vmul.f32 %v381, %v877
        %v879 = vadd.f32 %v874, %v878
        %s880 = sadd.s32 %s855, 5
        %s881 = sld [smem:[#allocation4 + %s880]]
        %v882 = vstv %s881
        %v883 = vmul.f32 %v387, %v882
        %v884 = vadd.f32 %v879, %v883
        %885 = vadd.xlane.f32.xlu0 %v884
        %v886 = vpop.xlane.xlu0 %885
        %v887 = vrot.slane %v886, 4
        %v888 = vadd.f32 %v886, %v887
        %v889 = vrot.slane %v888, 2
        %v890 = vadd.f32 %v888, %v889
        %v891 = vrot.slane %v890, 1
        %v892 = vadd.f32 %v890, %v891
        %s893 = vtos %v892
        %v894 = vstv %s893
        %v895 = vmul.f32 %v894, %v432
        %v896 = vmul.f32 %v884, %v884
        %897 = vadd.xlane.f32.xlu0 %v896
        %v898 = vpop.xlane.xlu0 %897
        %v899 = vrot.slane %v898, 4
        %v900 = vadd.f32 %v898, %v899
        %v901 = vrot.slane %v900, 2
        %v902 = vadd.f32 %v900, %v901
        %v903 = vrot.slane %v902, 1
        %v904 = vadd.f32 %v902, %v903
        %s905 = vtos %v904
        %v906 = vstv %s905
        %v907 = vmul.f32 %v906, %v432
        %v908 = vmul.f32 %v895, %v895
        %v909 = vsub.f32 %v907, %v908
        %v910 = vmax.f32 %v909, 0.0
        %v911 = vsub.f32 %v884, %v895
        %v912 = vadd.f32 %v910, 1e-05
        %v913 = vrsqrt.pop %v912
        %v914 = vmul.f32 %v911, %v913
        %v915 = vmax.f32 %v914, 0.0
        %916 = vst [vmem:[#allocation3 + $0x38] sm:$0xff] %v915
        %v917 = vld [vmem:[#allocation11] sm:$0xff]
        %v918 = vld [vmem:[#allocation3] sm:$0xff]
        %v919 = vld [vmem:[#allocation3 + $0x8] sm:$0xff]
        %v920 = vld [vmem:[#allocation3 + $0x10] sm:$0xff]
        %v921 = vld [vmem:[#allocation3 + $0x18] sm:$0xff]
        %v922 = vld [vmem:[#allocation3 + $0x20] sm:$0xff]
        %v923 = vld [vmem:[#allocation3 + $0x28] sm:$0xff]
        %v924 = vld [vmem:[#allocation3 + $0x30] sm:$0xff]
        %v925 = vld [vmem:[#allocation3 + $0x38] sm:$0xff]
        %v926 = vpack.c.bf16 %v918, %v918
        %v927 = vpack.c.bf16 %v919, %v919
        %v928 = vpack.c.bf16 %v920, %v920
        %v929 = vpack.c.bf16 %v921, %v921
        %v930 = vpack.c.bf16 %v922, %v922
        %v931 = vpack.c.bf16 %v923, %v923
        %v932 = vpack.c.bf16 %v924, %v924
        %v933 = vpack.c.bf16 %v925, %v925
        %v934 = vld [vmem:[%s262] sm:$0xf]
        %v935 = vld [vmem:[%s262 + $0x4] sm:$0xf]
        %v936 = vld [vmem:[%s262 + $0x8] sm:$0xf]
        %v937 = vld [vmem:[%s262 + $0xc] sm:$0xf]
        %v938 = vld [vmem:[%s262 + $0x10] sm:$0xf]
        %v939 = vld [vmem:[%s262 + $0x14] sm:$0xf]
        %v940 = vld [vmem:[%s262 + $0x18] sm:$0xf]
        %v941 = vld [vmem:[%s262 + $0x1c] sm:$0xf]
        %v942 = vld [vmem:[%s262 + $0x20] sm:$0xf]
        %v943 = vld [vmem:[%s262 + $0x24] sm:$0xf]
        %v944 = vld [vmem:[%s262 + $0x28] sm:$0xf]
        %v945 = vld [vmem:[%s262 + $0x2c] sm:$0xf]
        %v946 = vld [vmem:[%s262 + $0x30] sm:$0xf]
        %v947 = vld [vmem:[%s262 + $0x34] sm:$0xf]
        %v948 = vld [vmem:[%s262 + $0x38] sm:$0xf]
        %v949 = vld [vmem:[%s262 + $0x3c] sm:$0xf]
        %v950 = vld [vmem:[%s262 + $0x40] sm:$0xf]
        %v951 = vld [vmem:[%s262 + $0x44] sm:$0xf]
        %v952 = vld [vmem:[%s262 + $0x48] sm:$0xf]
        %v953 = vld [vmem:[%s262 + $0x4c] sm:$0xf]
        %v954 = vld [vmem:[%s262 + $0x50] sm:$0xf]
        %v955 = vld [vmem:[%s262 + $0x54] sm:$0xf]
        %v956 = vld [vmem:[%s262 + $0x58] sm:$0xf]
        %v957 = vld [vmem:[%s262 + $0x5c] sm:$0xf]
        %v958 = vld [vmem:[%s262 + $0x60] sm:$0xf]
        %v959 = vld [vmem:[%s262 + $0x64] sm:$0xf]
        %v960 = vld [vmem:[%s262 + $0x68] sm:$0xf]
        %v961 = vld [vmem:[%s262 + $0x6c] sm:$0xf]
        %v962 = vld [vmem:[%s262 + $0x70] sm:$0xf]
        %v963 = vld [vmem:[%s262 + $0x74] sm:$0xf]
        %v964 = vld [vmem:[%s262 + $0x78] sm:$0xf]
        %v965 = vld [vmem:[%s262 + $0x7c] sm:$0xf]
        %v966 = vld [vmem:[%s262 + $0x80] sm:$0xf]
        %v967 = vld [vmem:[%s262 + $0x84] sm:$0xf]
        %v968 = vld [vmem:[%s262 + $0x88] sm:$0xf]
        %v969 = vld [vmem:[%s262 + $0x8c] sm:$0xf]
        %v970 = vld [vmem:[%s262 + $0x90] sm:$0xf]
        %v971 = vld [vmem:[%s262 + $0x94] sm:$0xf]
        %v972 = vld [vmem:[%s262 + $0x98] sm:$0xf]
        %v973 = vld [vmem:[%s262 + $0x9c] sm:$0xf]
        %v974 = vld [vmem:[%s262 + $0xa0] sm:$0xf]
        %v975 = vld [vmem:[%s262 + $0xa4] sm:$0xf]
        %v976 = vld [vmem:[%s262 + $0xa8] sm:$0xf]
        %v977 = vld [vmem:[%s262 + $0xac] sm:$0xf]
        %v978 = vld [vmem:[%s262 + $0xb0] sm:$0xf]
        %v979 = vld [vmem:[%s262 + $0xb4] sm:$0xf]
        %v980 = vld [vmem:[%s262 + $0xb8] sm:$0xf]
        %v981 = vld [vmem:[%s262 + $0xbc] sm:$0xf]
        %v982 = vld [vmem:[%s262 + $0xc0] sm:$0xf]
        %v983 = vld [vmem:[%s262 + $0xc4] sm:$0xf]
        %v984 = vld [vmem:[%s262 + $0xc8] sm:$0xf]
        %v985 = vld [vmem:[%s262 + $0xcc] sm:$0xf]
        %v986 = vld [vmem:[%s262 + $0xd0] sm:$0xf]
        %v987 = vld [vmem:[%s262 + $0xd4] sm:$0xf]
        %v988 = vld [vmem:[%s262 + $0xd8] sm:$0xf]
        %v989 = vld [vmem:[%s262 + $0xdc] sm:$0xf]
        %v990 = vld [vmem:[%s262 + $0xe0] sm:$0xf]
        %v991 = vld [vmem:[%s262 + $0xe4] sm:$0xf]
        %v992 = vld [vmem:[%s262 + $0xe8] sm:$0xf]
        %v993 = vld [vmem:[%s262 + $0xec] sm:$0xf]
        %v994 = vld [vmem:[%s262 + $0xf0] sm:$0xf]
        %v995 = vld [vmem:[%s262 + $0xf4] sm:$0xf]
        %v996 = vld [vmem:[%s262 + $0xf8] sm:$0xf]
        %v997 = vld [vmem:[%s262 + $0xfc] sm:$0xf]
        %v998 = vld [vmem:[%s262 + $0x100] sm:$0xf]
        %v999 = vld [vmem:[%s262 + $0x104] sm:$0xf]
        %v1000 = vld [vmem:[%s262 + $0x108] sm:$0xf]
        %v1001 = vld [vmem:[%s262 + $0x10c] sm:$0xf]
        %v1002 = vld [vmem:[%s262 + $0x110] sm:$0xf]
        %v1003 = vld [vmem:[%s262 + $0x114] sm:$0xf]
        %v1004 = vld [vmem:[%s262 + $0x118] sm:$0xf]
        %v1005 = vld [vmem:[%s262 + $0x11c] sm:$0xf]
        %v1006 = vld [vmem:[%s262 + $0x120] sm:$0xf]
        %v1007 = vld [vmem:[%s262 + $0x124] sm:$0xf]
        %v1008 = vld [vmem:[%s262 + $0x128] sm:$0xf]
        %v1009 = vld [vmem:[%s262 + $0x12c] sm:$0xf]
        %v1010 = vld [vmem:[%s262 + $0x130] sm:$0xf]
        %v1011 = vld [vmem:[%s262 + $0x134] sm:$0xf]
        %v1012 = vld [vmem:[%s262 + $0x138] sm:$0xf]
        %v1013 = vld [vmem:[%s262 + $0x13c] sm:$0xf]
        %v1014 = vld [vmem:[%s262 + $0x140] sm:$0xf]
        %v1015 = vld [vmem:[%s262 + $0x144] sm:$0xf]
        %v1016 = vld [vmem:[%s262 + $0x148] sm:$0xf]
        %v1017 = vld [vmem:[%s262 + $0x14c] sm:$0xf]
        %v1018 = vld [vmem:[%s262 + $0x150] sm:$0xf]
        %v1019 = vld [vmem:[%s262 + $0x154] sm:$0xf]
        %v1020 = vld [vmem:[%s262 + $0x158] sm:$0xf]
        %v1021 = vld [vmem:[%s262 + $0x15c] sm:$0xf]
        %v1022 = vld [vmem:[%s262 + $0x160] sm:$0xf]
        %v1023 = vld [vmem:[%s262 + $0x164] sm:$0xf]
        %v1024 = vld [vmem:[%s262 + $0x168] sm:$0xf]
        %v1025 = vld [vmem:[%s262 + $0x16c] sm:$0xf]
        %v1026 = vld [vmem:[%s262 + $0x170] sm:$0xf]
        %v1027 = vld [vmem:[%s262 + $0x174] sm:$0xf]
        %v1028 = vld [vmem:[%s262 + $0x178] sm:$0xf]
        %v1029 = vld [vmem:[%s262 + $0x17c] sm:$0xf]
        %v1030 = vld [vmem:[%s262 + $0x180] sm:$0xf]
        %v1031 = vld [vmem:[%s262 + $0x184] sm:$0xf]
        %v1032 = vld [vmem:[%s262 + $0x188] sm:$0xf]
        %v1033 = vld [vmem:[%s262 + $0x18c] sm:$0xf]
        %v1034 = vld [vmem:[%s262 + $0x190] sm:$0xf]
        %v1035 = vld [vmem:[%s262 + $0x194] sm:$0xf]
        %v1036 = vld [vmem:[%s262 + $0x198] sm:$0xf]
        %v1037 = vld [vmem:[%s262 + $0x19c] sm:$0xf]
        %v1038 = vld [vmem:[%s262 + $0x1a0] sm:$0xf]
        %v1039 = vld [vmem:[%s262 + $0x1a4] sm:$0xf]
        %v1040 = vld [vmem:[%s262 + $0x1a8] sm:$0xf]
        %v1041 = vld [vmem:[%s262 + $0x1ac] sm:$0xf]
        %v1042 = vld [vmem:[%s262 + $0x1b0] sm:$0xf]
        %v1043 = vld [vmem:[%s262 + $0x1b4] sm:$0xf]
        %v1044 = vld [vmem:[%s262 + $0x1b8] sm:$0xf]
        %v1045 = vld [vmem:[%s262 + $0x1bc] sm:$0xf]
        %v1046 = vld [vmem:[%s262 + $0x1c0] sm:$0xf]
        %v1047 = vld [vmem:[%s262 + $0x1c4] sm:$0xf]
        %v1048 = vld [vmem:[%s262 + $0x1c8] sm:$0xf]
        %v1049 = vld [vmem:[%s262 + $0x1cc] sm:$0xf]
        %v1050 = vld [vmem:[%s262 + $0x1d0] sm:$0xf]
        %v1051 = vld [vmem:[%s262 + $0x1d4] sm:$0xf]
        %v1052 = vld [vmem:[%s262 + $0x1d8] sm:$0xf]
        %v1053 = vld [vmem:[%s262 + $0x1dc] sm:$0xf]
        %v1054 = vld [vmem:[%s262 + $0x1e0] sm:$0xf]
        %v1055 = vld [vmem:[%s262 + $0x1e4] sm:$0xf]
        %v1056 = vld [vmem:[%s262 + $0x1e8] sm:$0xf]
        %v1057 = vld [vmem:[%s262 + $0x1ec] sm:$0xf]
        %v1058 = vld [vmem:[%s262 + $0x1f0] sm:$0xf]
        %v1059 = vld [vmem:[%s262 + $0x1f4] sm:$0xf]
        %v1060 = vld [vmem:[%s262 + $0x1f8] sm:$0xf]
        %v1061 = vld [vmem:[%s262 + $0x1fc] sm:$0xf]
        %v1190 = vunpack.c.l.b16 %v934
        %v1191 = vunpack.c.l.b16 %v935
        %v1192 = vunpack.c.l.b16 %v936
        %v1193 = vunpack.c.l.b16 %v937
        %v1194 = vunpack.c.l.b16 %v938
        %v1195 = vunpack.c.l.b16 %v939
        %v1196 = vunpack.c.l.b16 %v940
        %v1197 = vunpack.c.l.b16 %v941
        %v1198 = vunpack.c.l.b16 %v942
        %v1199 = vunpack.c.l.b16 %v943
        %v1200 = vunpack.c.l.b16 %v944
        %v1201 = vunpack.c.l.b16 %v945
        %v1202 = vunpack.c.l.b16 %v946
        %v1203 = vunpack.c.l.b16 %v947
        %v1204 = vunpack.c.l.b16 %v948
        %v1205 = vunpack.c.l.b16 %v949
        %v1206 = vunpack.c.l.b16 %v950
        %v1207 = vunpack.c.l.b16 %v951
        %v1208 = vunpack.c.l.b16 %v952
        %v1209 = vunpack.c.l.b16 %v953
        %v1210 = vunpack.c.l.b16 %v954
        %v1211 = vunpack.c.l.b16 %v955
        %v1212 = vunpack.c.l.b16 %v956
        %v1213 = vunpack.c.l.b16 %v957
        %v1214 = vunpack.c.l.b16 %v958
        %v1215 = vunpack.c.l.b16 %v959
        %v1216 = vunpack.c.l.b16 %v960
        %v1217 = vunpack.c.l.b16 %v961
        %v1218 = vunpack.c.l.b16 %v962
        %v1219 = vunpack.c.l.b16 %v963
        %v1220 = vunpack.c.l.b16 %v964
        %v1221 = vunpack.c.l.b16 %v965
        %v1222 = vunpack.c.l.b16 %v966
        %v1223 = vunpack.c.l.b16 %v967
        %v1224 = vunpack.c.l.b16 %v968
        %v1225 = vunpack.c.l.b16 %v969
        %v1226 = vunpack.c.l.b16 %v970
        %v1227 = vunpack.c.l.b16 %v971
        %v1228 = vunpack.c.l.b16 %v972
        %v1229 = vunpack.c.l.b16 %v973
        %v1230 = vunpack.c.l.b16 %v974
        %v1231 = vunpack.c.l.b16 %v975
        %v1232 = vunpack.c.l.b16 %v976
        %v1233 = vunpack.c.l.b16 %v977
        %v1234 = vunpack.c.l.b16 %v978
        %v1235 = vunpack.c.l.b16 %v979
        %v1236 = vunpack.c.l.b16 %v980
        %v1237 = vunpack.c.l.b16 %v981
        %v1238 = vunpack.c.l.b16 %v982
        %v1239 = vunpack.c.l.b16 %v983
        %v1240 = vunpack.c.l.b16 %v984
        %v1241 = vunpack.c.l.b16 %v985
        %v1242 = vunpack.c.l.b16 %v986
        %v1243 = vunpack.c.l.b16 %v987
        %v1244 = vunpack.c.l.b16 %v988
        %v1245 = vunpack.c.l.b16 %v989
        %v1246 = vunpack.c.l.b16 %v990
        %v1247 = vunpack.c.l.b16 %v991
        %v1248 = vunpack.c.l.b16 %v992
        %v1249 = vunpack.c.l.b16 %v993
        %v1250 = vunpack.c.l.b16 %v994
        %v1251 = vunpack.c.l.b16 %v995
        %v1252 = vunpack.c.l.b16 %v996
        %v1253 = vunpack.c.l.b16 %v997
        %v1254 = vunpack.c.l.b16 %v998
        %v1255 = vunpack.c.l.b16 %v999
        %v1256 = vunpack.c.l.b16 %v1000
        %v1257 = vunpack.c.l.b16 %v1001
        %v1258 = vunpack.c.l.b16 %v1002
        %v1259 = vunpack.c.l.b16 %v1003
        %v1260 = vunpack.c.l.b16 %v1004
        %v1261 = vunpack.c.l.b16 %v1005
        %v1262 = vunpack.c.l.b16 %v1006
        %v1263 = vunpack.c.l.b16 %v1007
        %v1264 = vunpack.c.l.b16 %v1008
        %v1265 = vunpack.c.l.b16 %v1009
        %v1266 = vunpack.c.l.b16 %v1010
        %v1267 = vunpack.c.l.b16 %v1011
        %v1268 = vunpack.c.l.b16 %v1012
        %v1269 = vunpack.c.l.b16 %v1013
        %v1270 = vunpack.c.l.b16 %v1014
        %v1271 = vunpack.c.l.b16 %v1015
        %v1272 = vunpack.c.l.b16 %v1016
        %v1273 = vunpack.c.l.b16 %v1017
        %v1274 = vunpack.c.l.b16 %v1018
        %v1275 = vunpack.c.l.b16 %v1019
        %v1276 = vunpack.c.l.b16 %v1020
        %v1277 = vunpack.c.l.b16 %v1021
        %v1278 = vunpack.c.l.b16 %v1022
        %v1279 = vunpack.c.l.b16 %v1023
        %v1280 = vunpack.c.l.b16 %v1024
        %v1281 = vunpack.c.l.b16 %v1025
        %v1282 = vunpack.c.l.b16 %v1026
        %v1283 = vunpack.c.l.b16 %v1027
        %v1284 = vunpack.c.l.b16 %v1028
        %v1285 = vunpack.c.l.b16 %v1029
        %v1286 = vunpack.c.l.b16 %v1030
        %v1287 = vunpack.c.l.b16 %v1031
        %v1288 = vunpack.c.l.b16 %v1032
        %v1289 = vunpack.c.l.b16 %v1033
        %v1290 = vunpack.c.l.b16 %v1034
        %v1291 = vunpack.c.l.b16 %v1035
        %v1292 = vunpack.c.l.b16 %v1036
        %v1293 = vunpack.c.l.b16 %v1037
        %v1294 = vunpack.c.l.b16 %v1038
        %v1295 = vunpack.c.l.b16 %v1039
        %v1296 = vunpack.c.l.b16 %v1040
        %v1297 = vunpack.c.l.b16 %v1041
        %v1298 = vunpack.c.l.b16 %v1042
        %v1299 = vunpack.c.l.b16 %v1043
        %v1300 = vunpack.c.l.b16 %v1044
        %v1301 = vunpack.c.l.b16 %v1045
        %v1302 = vunpack.c.l.b16 %v1046
        %v1303 = vunpack.c.l.b16 %v1047
        %v1304 = vunpack.c.l.b16 %v1048
        %v1305 = vunpack.c.l.b16 %v1049
        %v1306 = vunpack.c.l.b16 %v1050
        %v1307 = vunpack.c.l.b16 %v1051
        %v1308 = vunpack.c.l.b16 %v1052
        %v1309 = vunpack.c.l.b16 %v1053
        %v1310 = vunpack.c.l.b16 %v1054
        %v1311 = vunpack.c.l.b16 %v1055
        %v1312 = vunpack.c.l.b16 %v1056
        %v1313 = vunpack.c.l.b16 %v1057
        %v1314 = vunpack.c.l.b16 %v1058
        %v1315 = vunpack.c.l.b16 %v1059
        %v1316 = vunpack.c.l.b16 %v1060
        %v1317 = vunpack.c.l.b16 %v1061
        %v1318 = vpack.c.b16 %v1191, %v1190
        %v1319 = vpack.c.b16 %v1193, %v1192
        %v1320 = vpack.c.b16 %v1195, %v1194
        %v1321 = vpack.c.b16 %v1197, %v1196
        %v1322 = vpack.c.b16 %v1199, %v1198
        %v1323 = vpack.c.b16 %v1201, %v1200
        %v1324 = vpack.c.b16 %v1203, %v1202
        %v1325 = vpack.c.b16 %v1205, %v1204
        %v1326 = vpack.c.b16 %v1207, %v1206
        %v1327 = vpack.c.b16 %v1209, %v1208
        %v1328 = vpack.c.b16 %v1211, %v1210
        %v1329 = vpack.c.b16 %v1213, %v1212
        %v1330 = vpack.c.b16 %v1215, %v1214
        %v1331 = vpack.c.b16 %v1217, %v1216
        %v1332 = vpack.c.b16 %v1219, %v1218
        %v1333 = vpack.c.b16 %v1221, %v1220
        %v1334 = vpack.c.b16 %v1223, %v1222
        %v1335 = vpack.c.b16 %v1225, %v1224
        %v1336 = vpack.c.b16 %v1227, %v1226
        %v1337 = vpack.c.b16 %v1229, %v1228
        %v1338 = vpack.c.b16 %v1231, %v1230
        %v1339 = vpack.c.b16 %v1233, %v1232
        %v1340 = vpack.c.b16 %v1235, %v1234
        %v1341 = vpack.c.b16 %v1237, %v1236
        %v1342 = vpack.c.b16 %v1239, %v1238
        %v1343 = vpack.c.b16 %v1241, %v1240
        %v1344 = vpack.c.b16 %v1243, %v1242
        %v1345 = vpack.c.b16 %v1245, %v1244
        %v1346 = vpack.c.b16 %v1247, %v1246
        %v1347 = vpack.c.b16 %v1249, %v1248
        %v1348 = vpack.c.b16 %v1251, %v1250
        %v1349 = vpack.c.b16 %v1253, %v1252
        %v1350 = vpack.c.b16 %v1255, %v1254
        %v1351 = vpack.c.b16 %v1257, %v1256
        %v1352 = vpack.c.b16 %v1259, %v1258
        %v1353 = vpack.c.b16 %v1261, %v1260
        %v1354 = vpack.c.b16 %v1263, %v1262
        %v1355 = vpack.c.b16 %v1265, %v1264
        %v1356 = vpack.c.b16 %v1267, %v1266
        %v1357 = vpack.c.b16 %v1269, %v1268
        %v1358 = vpack.c.b16 %v1271, %v1270
        %v1359 = vpack.c.b16 %v1273, %v1272
        %v1360 = vpack.c.b16 %v1275, %v1274
        %v1361 = vpack.c.b16 %v1277, %v1276
        %v1362 = vpack.c.b16 %v1279, %v1278
        %v1363 = vpack.c.b16 %v1281, %v1280
        %v1364 = vpack.c.b16 %v1283, %v1282
        %v1365 = vpack.c.b16 %v1285, %v1284
        %v1366 = vpack.c.b16 %v1287, %v1286
        %v1367 = vpack.c.b16 %v1289, %v1288
        %v1368 = vpack.c.b16 %v1291, %v1290
        %v1369 = vpack.c.b16 %v1293, %v1292
        %v1370 = vpack.c.b16 %v1295, %v1294
        %v1371 = vpack.c.b16 %v1297, %v1296
        %v1372 = vpack.c.b16 %v1299, %v1298
        %v1373 = vpack.c.b16 %v1301, %v1300
        %v1374 = vpack.c.b16 %v1303, %v1302
        %v1375 = vpack.c.b16 %v1305, %v1304
        %v1376 = vpack.c.b16 %v1307, %v1306
        %v1377 = vpack.c.b16 %v1309, %v1308
        %v1378 = vpack.c.b16 %v1311, %v1310
        %v1379 = vpack.c.b16 %v1313, %v1312
        %v1380 = vpack.c.b16 %v1315, %v1314
        %v1381 = vpack.c.b16 %v1317, %v1316
        %1446 = vmatprep.subr.bf16.mxu0 0
        %1447 = vmatpush1.bf16.msra.mxu0 %v1325
        %1448 = vmatprep.subr.bf16.mxu0 0
        %1449 = vmatpush1.bf16.msra.mxu0 %v1324
        %1450 = vmatprep.subr.bf16.mxu0 0
        %1451 = vmatpush1.bf16.msra.mxu0 %v1323
        %1452 = vmatprep.subr.bf16.mxu0 0
        %1453 = vmatpush1.bf16.msra.mxu0 %v1322
        %1454 = vmatprep.subr.bf16.mxu0 0
        %1455 = vmatpush1.bf16.msra.mxu0 %v1321
        %1456 = vmatprep.subr.bf16.mxu0 0
        %1457 = vmatpush1.bf16.msra.mxu0 %v1320
        %1458 = vmatprep.subr.bf16.mxu0 0
        %1459 = vmatpush1.bf16.msra.mxu0 %v1319
        %1460 = vmatprep.subr.bf16.mxu0 0
        %1461 = vmatpush1.bf16.msra.mxu0 %v1318
        %1462 = vmatprep.subr.bf16.mxu0 0
        %1463 = vmatpush2.bf16.msra.mxu0 %v1333
        %1464 = vmatprep.subr.bf16.mxu0 0
        %1465 = vmatpush2.bf16.msra.mxu0 %v1332
        %1466 = vmatprep.subr.bf16.mxu0 0
        %1467 = vmatpush2.bf16.msra.mxu0 %v1331
        %1468 = vmatprep.subr.bf16.mxu0 0
        %1469 = vmatpush2.bf16.msra.mxu0 %v1330
        %1470 = vmatprep.subr.bf16.mxu0 0
        %1471 = vmatpush2.bf16.msra.mxu0 %v1329
        %1472 = vmatprep.subr.bf16.mxu0 0
        %1473 = vmatpush2.bf16.msra.mxu0 %v1328
        %1474 = vmatprep.subr.bf16.mxu0 0
        %1475 = vmatpush2.bf16.msra.mxu0 %v1327
        %1476 = vmatprep.subr.bf16.mxu0 0
        %1477 = vmatpush2.bf16.msra.mxu0 %v1326
        %1478 = vmatprep.mubr.bf16.mxu0 %v927
        %1479 = vmatmul.mubr.bf16.gmra.mxu0 %v926
        %v1480 = vpop.f32.mrf.mxu0
        %v1481 = vadd.f32 0.0, %v1480
        %v1482 = vpop.f32.mrf.mxu0
        %v1483 = vpop.f32.mrf.mxu0
        %v1484 = vpop.f32.mrf.mxu0
        %1485 = vdwg.mxu0
        %1486 = vmatprep.subr.bf16.mxu0 0
        %1487 = vmatpush1.bf16.msra.mxu0 %v1341
        %1488 = vmatprep.subr.bf16.mxu0 0
        %1489 = vmatpush1.bf16.msra.mxu0 %v1340
        %1490 = vmatprep.subr.bf16.mxu0 0
        %1491 = vmatpush1.bf16.msra.mxu0 %v1339
        %1492 = vmatprep.subr.bf16.mxu0 0
        %1493 = vmatpush1.bf16.msra.mxu0 %v1338
        %1494 = vmatprep.subr.bf16.mxu0 0
        %1495 = vmatpush1.bf16.msra.mxu0 %v1337
        %1496 = vmatprep.subr.bf16.mxu0 0
        %1497 = vmatpush1.bf16.msra.mxu0 %v1336
        %1498 = vmatprep.subr.bf16.mxu0 0
        %1499 = vmatpush1.bf16.msra.mxu0 %v1335
        %1500 = vmatprep.subr.bf16.mxu0 0
        %1501 = vmatpush1.bf16.msra.mxu0 %v1334
        %1502 = vmatprep.subr.bf16.mxu0 0
        %1503 = vmatpush2.bf16.msra.mxu0 %v1349
        %1504 = vmatprep.subr.bf16.mxu0 0
        %1505 = vmatpush2.bf16.msra.mxu0 %v1348
        %1506 = vmatprep.subr.bf16.mxu0 0
        %1507 = vmatpush2.bf16.msra.mxu0 %v1347
        %1508 = vmatprep.subr.bf16.mxu0 0
        %1509 = vmatpush2.bf16.msra.mxu0 %v1346
        %1510 = vmatprep.subr.bf16.mxu0 0
        %1511 = vmatpush2.bf16.msra.mxu0 %v1345
        %1512 = vmatprep.subr.bf16.mxu0 0
        %1513 = vmatpush2.bf16.msra.mxu0 %v1344
        %1514 = vmatprep.subr.bf16.mxu0 0
        %1515 = vmatpush2.bf16.msra.mxu0 %v1343
        %1516 = vmatprep.subr.bf16.mxu0 0
        %1517 = vmatpush2.bf16.msra.mxu0 %v1342
        %1518 = vmatprep.mubr.bf16.mxu0 %v929
        %1519 = vmatmul.mubr.bf16.gmra.mxu0 %v928
        %v1520 = vpop.f32.mrf.mxu0
        %v1521 = vadd.f32 %v1481, %v1520
        %v1522 = vpop.f32.mrf.mxu0
        %v1523 = vpop.f32.mrf.mxu0
        %v1524 = vpop.f32.mrf.mxu0
        %1525 = vdwg.mxu0
        %1526 = vmatprep.subr.bf16.mxu0 0
        %1527 = vmatpush1.bf16.msra.mxu0 %v1357
        %1528 = vmatprep.subr.bf16.mxu0 0
        %1529 = vmatpush1.bf16.msra.mxu0 %v1356
        %1530 = vmatprep.subr.bf16.mxu0 0
        %1531 = vmatpush1.bf16.msra.mxu0 %v1355
        %1532 = vmatprep.subr.bf16.mxu0 0
        %1533 = vmatpush1.bf16.msra.mxu0 %v1354
        %1534 = vmatprep.subr.bf16.mxu0 0
        %1535 = vmatpush1.bf16.msra.mxu0 %v1353
        %1536 = vmatprep.subr.bf16.mxu0 0
        %1537 = vmatpush1.bf16.msra.mxu0 %v1352
        %1538 = vmatprep.subr.bf16.mxu0 0
        %1539 = vmatpush1.bf16.msra.mxu0 %v1351
        %1540 = vmatprep.subr.bf16.mxu0 0
        %1541 = vmatpush1.bf16.msra.mxu0 %v1350
        %1542 = vmatprep.subr.bf16.mxu0 0
        %1543 = vmatpush2.bf16.msra.mxu0 %v1365
        %1544 = vmatprep.subr.bf16.mxu0 0
        %1545 = vmatpush2.bf16.msra.mxu0 %v1364
        %1546 = vmatprep.subr.bf16.mxu0 0
        %1547 = vmatpush2.bf16.msra.mxu0 %v1363
        %1548 = vmatprep.subr.bf16.mxu0 0
        %1549 = vmatpush2.bf16.msra.mxu0 %v1362
        %1550 = vmatprep.subr.bf16.mxu0 0
        %1551 = vmatpush2.bf16.msra.mxu0 %v1361
        %1552 = vmatprep.subr.bf16.mxu0 0
        %1553 = vmatpush2.bf16.msra.mxu0 %v1360
        %1554 = vmatprep.subr.bf16.mxu0 0
        %1555 = vmatpush2.bf16.msra.mxu0 %v1359
        %1556 = vmatprep.subr.bf16.mxu0 0
        %1557 = vmatpush2.bf16.msra.mxu0 %v1358
        %1558 = vmatprep.mubr.bf16.mxu0 %v931
        %1559 = vmatmul.mubr.bf16.gmra.mxu0 %v930
        %v1560 = vpop.f32.mrf.mxu0
        %v1561 = vadd.f32 %v1521, %v1560
        %v1562 = vpop.f32.mrf.mxu0
        %v1563 = vpop.f32.mrf.mxu0
        %v1564 = vpop.f32.mrf.mxu0
        %1565 = vdwg.mxu0
        %1566 = vmatprep.subr.bf16.mxu0 0
        %1567 = vmatpush1.bf16.msra.mxu0 %v1373
        %1568 = vmatprep.subr.bf16.mxu0 0
        %1569 = vmatpush1.bf16.msra.mxu0 %v1372
        %1570 = vmatprep.subr.bf16.mxu0 0
        %1571 = vmatpush1.bf16.msra.mxu0 %v1371
        %1572 = vmatprep.subr.bf16.mxu0 0
        %1573 = vmatpush1.bf16.msra.mxu0 %v1370
        %1574 = vmatprep.subr.bf16.mxu0 0
        %1575 = vmatpush1.bf16.msra.mxu0 %v1369
        %1576 = vmatprep.subr.bf16.mxu0 0
        %1577 = vmatpush1.bf16.msra.mxu0 %v1368
        %1578 = vmatprep.subr.bf16.mxu0 0
        %1579 = vmatpush1.bf16.msra.mxu0 %v1367
        %1580 = vmatprep.subr.bf16.mxu0 0
        %1581 = vmatpush1.bf16.msra.mxu0 %v1366
        %1582 = vmatprep.subr.bf16.mxu0 0
        %1583 = vmatpush2.bf16.msra.mxu0 %v1381
        %1584 = vmatprep.subr.bf16.mxu0 0
        %1585 = vmatpush2.bf16.msra.mxu0 %v1380
        %1586 = vmatprep.subr.bf16.mxu0 0
        %1587 = vmatpush2.bf16.msra.mxu0 %v1379
        %1588 = vmatprep.subr.bf16.mxu0 0
        %1589 = vmatpush2.bf16.msra.mxu0 %v1378
        %1590 = vmatprep.subr.bf16.mxu0 0
        %1591 = vmatpush2.bf16.msra.mxu0 %v1377
        %1592 = vmatprep.subr.bf16.mxu0 0
        %1593 = vmatpush2.bf16.msra.mxu0 %v1376
        %1594 = vmatprep.subr.bf16.mxu0 0
        %1595 = vmatpush2.bf16.msra.mxu0 %v1375
        %1596 = vmatprep.subr.bf16.mxu0 0
        %1597 = vmatpush2.bf16.msra.mxu0 %v1374
        %1598 = vmatprep.mubr.bf16.mxu0 %v933
        %1599 = vmatmul.mubr.bf16.gmra.mxu0 %v932
        %v1600 = vpop.f32.mrf.mxu0
        %v1601 = vadd.f32 %v1561, %v1600
        %v1602 = vpop.f32.mrf.mxu0
        %v1603 = vpop.f32.mrf.mxu0
        %v1604 = vpop.f32.mrf.mxu0
        %1605 = vdwg.mxu0
        %v1606 = vadd.f32 %v917, %v1601
        %1607 = vst [vmem:[#allocation11] sm:$0xff] %v1606
        %p1608 = scmp.eq.s32.totalorder %s23, 1
        // Predicated region
        $region61: #{tpu_custom_call.1} parent=43 // pred_check
          %p1609 = pneg %p1608
        $region62: #{tpu_custom_call.1} parent=43 // pred_check_branch
          %1611 = sbr.rel (%p1609) target = $region64
        $region63: #{tpu_custom_call.1} parent=43 // pred_region
          %v1612 = vld [vmem:[#allocation11] sm:$0xff]
          %v1613 = vrot.slane %v1612, 4
          %v1614 = vadd.f32 %v1612, %v1613
          %v1615 = vrot.slane %v1614, 2
          %v1616 = vadd.f32 %v1614, %v1615
          %v1617 = vrot.slane %v1616, 1
          %v1618 = vadd.f32 %v1616, %v1617
          %v1619 = vrcp.pop 8.0
          %v1620 = vmul.f32 %v1618, %v1619
          %v1621 = vmul.f32 %v1612, %v1612
          %v1622 = vrot.slane %v1621, 4
          %v1623 = vadd.f32 %v1621, %v1622
          %v1624 = vrot.slane %v1623, 2
          %v1625 = vadd.f32 %v1623, %v1624
          %v1626 = vrot.slane %v1625, 1
          %v1627 = vadd.f32 %v1625, %v1626
          %v1628 = vmul.f32 %v1627, %v1619
          %v1629 = vmul.f32 %v1620, %v1620
          %v1630 = vsub.f32 %v1628, %v1629
          %v1631 = vmax.f32 %v1630, 0.0
          %v1632 = vsub.f32 %v1612, %v1620
          %v1633 = vadd.f32 %v1631, 1e-05
          %v1634 = vrsqrt.pop %v1633
          %v1635 = vmul.f32 %v1632, %v1634
          %v1636 = vmax.f32 %v1635, 0.0
          %1637 = vst [vmem:[#allocation11] sm:$0xff] %v1636
        $region64: #{tpu_custom_call.1} parent=43 // pred_fallthru
          _
        // Predicated region
        $region65: #{tpu_custom_call.1} parent=43 // pred_check
          %p1638 = pneg %p167
        $region66: #{tpu_custom_call.1} parent=43 // pred_check_branch
          %1640 = sbr.rel (%p1638) target = $region68
        $region67: #{tpu_custom_call.1} parent=43 // pred_region
          %s1642 = ssub.s32 128, 128
          %1643 = vsyncadd [#allocation6], %s1642
          %s1645 = sshll.u32 [#allocation11], 4
          %s1646 = int_to_ptr.vmem [resolvable:$true] %s1645
          %1648 = dma.vmem_to_hbm [thread:$0]  %s1646, 128, %s6, [#allocation6]
        $region68: #{tpu_custom_call.1} parent=43 // pred_fallthru
          _
        // Predicated region
        $region69: #{tpu_custom_call.1} parent=43 // pred_check
          %p1649 = pneg %p167
        $region70: #{tpu_custom_call.1} parent=43 // pred_check_branch
          %1651 = sbr.rel (%p1649) target = $region72
        $region71: #{tpu_custom_call.1} parent=43 // pred_region
          %1652 = dma.done [#allocation6], 128
        $region72: #{tpu_custom_call.1} parent=43 // pred_fallthru
          _
      $region44: #{tpu_custom_call.1} parent=5 // pred_fallthru
        _
      %p1653 = scmp.le.s32.totalorder 2, %s18
      // Predicated region
      $region73: #{tpu_custom_call.1} parent=5 // pred_check
        %p1654 = pneg %p1653
      $region74: #{tpu_custom_call.1} parent=5 // pred_check_branch
        %1656 = sbr.rel (%p1654) target = $region76
      $region75: #{tpu_custom_call.1} parent=5 // pred_region
        %s1657 = ssub.s32 %s18, 2
      $region76: #{tpu_custom_call.1} parent=5 // pred_fallthru
        _
    $region6: #{tpu_custom_call.1} parent=1 // loop_footer
      %s22 = sadd.s32 1, %s18
    $region7: #{tpu_custom_call.1} parent=1 // loop_footer_branch
      %17 = sbr.rel target = $region3
    $region8: #{tpu_custom_call.1} parent=1 // loop_exit
      _
    %1658 = vsyncpa [#allocation5], 1
    %s1659 = scalar_lea.sflag [#allocation5], 1
    %1660 = vsyncpa %s1659, 1
    %1661 = vsyncpa [#allocation6], 1
    %s1662 = scalar_lea.sflag [#allocation6], 1
    %1663 = vsyncpa %s1662, 1
    %1664 = vsyncpa [#allocation7], 1
    %s1665 = scalar_lea.sflag [#allocation7], 1
    %1666 = vsyncpa %s1665, 1
    %1667 = vsyncpa [#allocation9], 1

</llo_original>
